<compile_context>
chip_gen: v6e
topology: v6e:2x2x1
jax: 0.10.0
libtpu: 0.0.40
codegen_flags: <defaults>
</compile_context>

<pallas_src>
import math
import jax
import jax.numpy as jnp
from jax import lax
from jax.experimental import pallas as pl
from jax.experimental.pallas import tpu as pltpu

# ---- model dims (small, synthetic) ----
B = 3            # batch of utterances
S = 12           # padded tokenized length (incl. [CLS]/[SEP])
BS = B * S       # flattened batch*sequence rows
D = 32           # hidden size
F = 64           # FFN intermediate size
H = 2            # attention heads
HD = D // H      # head dim
MAX_LEN = 8      # max_length argument of forward()
V = 32           # vocab size (synthetic)
LN_EPS = 1e-12
NEG_INF = -1e30

# lane layout of the packed embedding slab (BS, 128)
_POS0 = 0        # pos_flat              lanes [0, D)
_IDS0 = D        # token ids (f32, rep.) lanes [D, D+V)
_TOK0 = D + V    # tok_emb (rows 0:V)    lanes [D+V, D+V+D)
EMB_LANES = 128


def _gelu(x):
    # TODO(synk): HF BERT uses exact erf-GELU; tanh approximation used here
    # (erf has no guaranteed Mosaic lowering).
    return 0.5 * x * (1.0 + jnp.tanh(0.7978845608028654 * (x + 0.044715 * x * x * x)))


def encoder_kernel(lens_ref,   # scalar prefetch (SMEM): (B,) int32 true lengths
                   emb_ref,    # (BS, 128): [pos_flat | ids(f32) | tok_emb | 0]
                   w_ref,      # (D, 128):  [Wq*scale | Wk | Wv | Wo]
                   ffn_ref,    # (D, 128):  [W1 | W2^T]
                   vec_ref,    # (8, 128):  bqkv, b1, bo, g1, be1, b2, g2, be2
                   out_ref):   # (B*MAX_LEN, D)
    f32 = jnp.float32

    # ---- unpack packed slabs (static slices only) ----
    pos = emb_ref[:, _POS0:_POS0 + D]                          # (BS, D)
    ids = emb_ref[:, _IDS0:_IDS0 + V].astype(jnp.int32)        # (BS, V) replicated ids
    tok_emb = emb_ref[0:V, _TOK0:_TOK0 + D]                    # (V, D)
    wqkv = w_ref[:, 0:3 * D]                                   # (D, 3D) scale folded into Q
    wo = w_ref[:, 3 * D:4 * D]                                 # (D, D)
    w1 = ffn_ref[:, 0:F]                                       # (D, F)
    w2t = ffn_ref[:, F:2 * F]                                  # (D, F) == W2^T
    bqkv = vec_ref[0:1, 0:3 * D]
    b1 = vec_ref[1:2, 0:F]
    bo = vec_ref[2:3, 0:D]
    g1 = vec_ref[3:4, 0:D]
    be1 = vec_ref[4:5, 0:D]
    b2 = vec_ref[5:6, 0:D]
    g2 = vec_ref[6:7, 0:D]
    be2 = vec_ref[7:8, 0:D]

    # ---- token-embedding gather (one-hot matmul) + position add ----
    onehot = (ids == lax.broadcasted_iota(jnp.int32, (BS, V), 1)).astype(f32)
    x = jnp.dot(onehot, tok_emb, preferred_element_type=f32) + pos        # (BS, D)

    # ---- block-diagonal + key-length mask, built from small row/col vectors,
    #      directly at the head-stacked size (2*BS, BS) ----
    r = lax.broadcasted_iota(jnp.int32, (2 * BS, 1), 0)
    qr = jnp.where(r < BS, r, r - BS)                 # original query row of stacked row
    q_blk = jnp.zeros((2 * BS, 1), jnp.int32)
    c = lax.broadcasted_iota(jnp.int32, (1, BS), 1)
    k_blk = jnp.zeros((1, BS), jnp.int32)
    for b in range(1, B):                             # static loops over tiny vectors
        q_blk = q_blk + (qr >= b * S).astype(jnp.int32)
        k_blk = k_blk + (c >= b * S).astype(jnp.int32)
    k_pos = c - k_blk * S
    k_len = jnp.zeros((1, BS), jnp.int32)
    for b in range(B):
        k_len = jnp.where(k_blk == b, lens_ref[b], k_len)
    mask = (q_blk == k_blk) & (k_pos < k_len)         # ONE outer compare + AND
    bias = jnp.where(mask, f32(0.0), f32(NEG_INF))    # (2*BS, BS)

    # ---- fused QKV projection (one MXU pass, 3D-wide N) ----
    qkv = jnp.dot(x, wqkv, preferred_element_type=f32) + bqkv             # (BS, 3D)
    q = qkv[:, 0:D]
    k = qkv[:, D:2 * D]
    v = qkv[:, 2 * D:3 * D]

    # ---- attention: both heads share ONE scores matmul / softmax / ctx matmul ----
    # q_bd = [[q0, 0], [0, q1]]  so  q_bd @ k^T = [q0 @ k0^T ; q1 @ k1^T]
    lane = lax.broadcasted_iota(jnp.int32, (BS, D), 1)
    q_bd = jnp.concatenate([jnp.where(lane < HD, q, f32(0.0)),
                            jnp.where(lane >= HD, q, f32(0.0))], axis=0)  # (2BS, D)
    s = lax.dot_general(q_bd, k, (((1,), (1,)), ((), ())),
                        preferred_element_type=f32) + bias                # (2BS, BS)
    s = s - jnp.max(s, axis=-1, keepdims=True)
    p = jnp.exp(s)
    p = p / jnp.sum(p, axis=-1, keepdims=True)        # exact divide (review note)
    pv = jnp.dot(p, v, preferred_element_type=f32)                        # (2BS, D)
    # head-0 ctx is pv[0:BS, 0:HD]; head-1 ctx is pv[BS:2BS, HD:D] -> lane select
    ctx = jnp.where(lane < HD, pv[0:BS, :], pv[BS:2 * BS, :])             # (BS, D)
    attn = jnp.dot(ctx, wo, preferred_element_type=f32) + bo              # single Wo pass

    # ---- residual + LayerNorm 1 ----
    h1 = x + attn
    mu1 = jnp.mean(h1, axis=-1, keepdims=True)
    var1 = jnp.mean((h1 - mu1) ** 2, axis=-1, keepdims=True)
    h1n = (h1 - mu1) * lax.rsqrt(var1 + LN_EPS) * g1 + be1

    # ---- feed-forward (W2 pre-transposed: implicit rhs-transpose matmul) ----
    ff = jnp.dot(h1n, w1, preferred_element_type=f32) + b1
    ff = _gelu(ff)
    ff = lax.dot_general(ff, w2t, (((1,), (1,)), ((), ())),
                         preferred_element_type=f32) + b2

    # ---- residual + LayerNorm 2 -> last_hidden_state ----
    h2 = h1n + ff
    mu2 = jnp.mean(h2, axis=-1, keepdims=True)
    var2 = jnp.mean((h2 - mu2) ** 2, axis=-1, keepdims=True)
    hidden = (h2 - mu2) * lax.rsqrt(var2 + LN_EPS) * g2 + be2             # (BS, D)

    # ---- strip [CLS]/[SEP], zero-pad: one contiguous 8-row slice + store per batch ----
    t = lax.broadcasted_iota(jnp.int32, (MAX_LEN, 1), 0)
    for b in range(B):                                                    # static
        rows = hidden[b * S + 1:b * S + 1 + MAX_LEN, :]                   # skip [CLS]
        valid = t < (lens_ref[b] - 2)
        out_ref[b * MAX_LEN:(b + 1) * MAX_LEN, :] = (
            jnp.where(valid, rows, f32(0.0)).astype(out_ref.dtype))


def transformer_embed(token_ids, lens, params, max_length=MAX_LEN):
    """token_ids: (B, S) int32 padded ids, lens: (B,) int32 lengths (incl CLS/SEP)."""
    assert token_ids.shape == (B, S) and max_length == MAX_LEN
    ids_col = token_ids.reshape(BS, 1).astype(jnp.float32)
    emb_slab = params["emb_base"].at[:, _IDS0:_IDS0 + V].set(
        jnp.broadcast_to(ids_col, (BS, V)))

    def spec2d(shape):
        return pl.BlockSpec(shape, lambda i, lens_ref: (0, 0))

    grid_spec = pltpu.PrefetchScalarGridSpec(
        num_scalar_prefetch=1,
        grid=(1,),                        # single program: whole batch resident in VMEM
        in_specs=[spec2d((BS, EMB_LANES)),
                  spec2d((D, 128)),
                  spec2d((D, 128)),
                  spec2d((8, 128))],
        out_specs=pl.BlockSpec((B * MAX_LEN, D), lambda i, lens_ref: (0, 0)),
    )

    out_flat = pl.pallas_call(
        encoder_kernel,
        out_shape=jax.ShapeDtypeStruct((B * MAX_LEN, D), jnp.float32),
        grid_spec=grid_spec,
        compiler_params=pltpu.CompilerParams(dimension_semantics=("arbitrary",)),
    )(lens, emb_slab, params["w_slab"], params["ffn_slab"], params["vec_slab"])
    return out_flat.reshape(B, max_length, D)


def init_params(key):
    # TODO(synk): HF tokenizer + pretrained checkpoint loading have no Pallas
    # equivalent; weights are synthetic and deterministic.
    ks = jax.random.split(key, 8)
    scale = 0.02
    return {
        "tok_emb": scale * jax.random.normal(ks[0], (V, D), jnp.float32),
        "pos_emb": scale * jax.random.normal(ks[1], (S, D), jnp.float32),
        "wq": scale * jax.random.normal(ks[2], (D, D), jnp.float32),
        "wk": scale * jax.random.normal(ks[3], (D, D), jnp.float32),
        "wv": scale * jax.random.normal(ks[4], (D, D), jnp.float32),
        "wo": scale * jax.random.normal(ks[5], (D, D), jnp.float32),
        "w1": scale * jax.random.normal(ks[6], (D, F), jnp.float32),
        "w2": scale * jax.random.normal(ks[7], (F, D), jnp.float32),
        "bq": jnp.zeros((1, D), jnp.float32), "bk": jnp.zeros((1, D), jnp.float32),
        "bv": jnp.zeros((1, D), jnp.float32), "bo": jnp.zeros((1, D), jnp.float32),
        "b1": jnp.zeros((1, F), jnp.float32), "b2": jnp.zeros((1, D), jnp.float32),
        "g1": jnp.ones((1, D), jnp.float32), "be1": jnp.zeros((1, D), jnp.float32),
        "g2": jnp.ones((1, D), jnp.float32), "be2": jnp.zeros((1, D), jnp.float32),
    }


def prepare_params(p):
    """One-time transforms: QKV fusion, scale folding, lane-dense slab packing."""
    sm_scale = 1.0 / math.sqrt(HD)
    wqkv = jnp.concatenate([p["wq"] * sm_scale, p["wk"], p["wv"]], axis=1)  # (D, 3D)
    w_slab = jnp.concatenate([wqkv, p["wo"]], axis=1)                       # (D, 128)
    ffn_slab = jnp.concatenate([p["w1"], p["w2"].T], axis=1)                # (D, 128)

    vec_slab = jnp.zeros((8, 128), jnp.float32)
    bqkv = jnp.concatenate([p["bq"] * sm_scale, p["bk"], p["bv"]], axis=1)  # (1, 3D)
    vec_slab = vec_slab.at[0, 0:3 * D].set(bqkv[0])
    vec_slab = vec_slab.at[1, 0:F].set(p["b1"][0])
    for i, name in enumerate(["bo", "g1", "be1", "b2", "g2", "be2"]):
        vec_slab = vec_slab.at[2 + i, 0:D].set(p[name][0])

    emb_base = jnp.zeros((BS, EMB_LANES), jnp.float32)
    emb_base = emb_base.at[:, _POS0:_POS0 + D].set(jnp.tile(p["pos_emb"], (B, 1)))
    emb_base = emb_base.at[0:V, _TOK0:_TOK0 + D].set(p["tok_emb"])
    return {"w_slab": w_slab, "ffn_slab": ffn_slab,
            "vec_slab": vec_slab, "emb_base": emb_base}


def reference_embed(token_ids, lens, raw, max_length):
    """Pure-JAX per-utterance reference mirroring the PyTorch module semantics."""
    hi = jax.lax.Precision.HIGHEST
    mm = lambda a, b: jnp.dot(a, b, precision=hi)
    sm = 1.0 / math.sqrt(HD)
    outs = []
    for b in range(B):
        L = int(lens[b])
        x = raw["tok_emb"][token_ids[b, :L]] + raw["pos_emb"][:L]           # (L, D)
        q = mm(x, raw["wq"]) + raw["bq"]
        k = mm(x, raw["wk"]) + raw["bk"]
        v = mm(x, raw["wv"]) + raw["bv"]
        ctxs = []
        for h in range(H):
            sl = slice(h * HD, (h + 1) * HD)
            s = mm(q[:, sl], k[:, sl].T) * sm
            p = jax.nn.softmax(s, axis=-1)
            ctxs.append(mm(p, v[:, sl]))
        attn = mm(jnp.concatenate(ctxs, axis=1), raw["wo"]) + raw["bo"]
        h1 = x + attn
        h1n = ((h1 - h1.mean(-1, keepdims=True))
               / jnp.sqrt(h1.var(-1, keepdims=True) + LN_EPS) * raw["g1"] + raw["be1"])
        ff = _gelu(mm(h1n, raw["w1"]) + raw["b1"])
        ff = mm(ff, raw["w2"]) + raw["b2"]
        h2 = h1n + ff
        hid = ((h2 - h2.mean(-1, keepdims=True))
               / jnp.sqrt(h2.var(-1, keepdims=True) + LN_EPS) * raw["g2"] + raw["be2"])
        body = hid[1:L - 1]                                                 # strip CLS/SEP
        pad = jnp.zeros((max_length - body.shape[0], D), jnp.float32)
        outs.append(jnp.concatenate([body, pad], axis=0))
    return jnp.stack(outs)


if __name__ == "__main__":
    key = jax.random.PRNGKey(0)
    pkey, ikey = jax.random.split(key)
    raw = init_params(pkey)
    params = prepare_params(raw)

    # synthetic "tokenized utterances": id 1 = [CLS], id 2 = [SEP], 0 = pad
    lens = jnp.array([7, 10, 6], dtype=jnp.int32)              # true lengths incl CLS/SEP
    body = jax.random.randint(ikey, (B, S), 3, V, dtype=jnp.int32)
    posi = jnp.arange(S)[None, :]
    token_ids = jnp.where(posi == 0, 1, body)                  # [CLS]
    token_ids = jnp.where(posi == (lens[:, None] - 1), 2, token_ids)   # [SEP]
    token_ids = jnp.where(posi < lens[:, None], token_ids, 0)  # pad
    token_ids = token_ids.astype(jnp.int32)

    embed = transformer_embed(token_ids, lens, params, max_length=MAX_LEN)
    embed = jax.block_until_ready(embed)

    assert embed.shape == (B, MAX_LEN, D), embed.shape
    # padded region beyond (len - 2) must be exactly zero
    valid = (jnp.arange(MAX_LEN)[None, :] < (lens[:, None] - 2))
    assert bool(jnp.all(jnp.where(valid[..., None], True, embed == 0.0)))
    # matches the per-utterance pure-JAX reference
    ref = reference_embed(token_ids, lens, raw, MAX_LEN)
    assert jnp.allclose(embed, ref, atol=5e-3, rtol=5e-3), float(jnp.max(jnp.abs(embed - ref)))
    print("KERNEL_OK")
</pallas_src>

<mosaic_0001>
module attributes {stable_mosaic.version = 11 : i64} {
  func.func @encoder_kernel(%arg0: i32, %arg1: memref<3xi32, #tpu.memory_space<smem>>, %arg2: memref<36x128xf32, #tpu.memory_space<vmem>>, %arg3: memref<32x128xf32, #tpu.memory_space<vmem>>, %arg4: memref<32x128xf32, #tpu.memory_space<vmem>>, %arg5: memref<8x128xf32, #tpu.memory_space<vmem>>, %arg6: memref<24x32xf32, #tpu.memory_space<vmem>>) attributes {dimension_semantics = [#tpu.dimension_semantics<arbitrary>], iteration_bounds = array<i64: 1>, scalar_prefetch = 1 : i64, scratch_operands = 0 : i64, tpu.core_type = #tpu.core_type<tc>, window_params = [{pipeline_mode = #tpu.pipeline_mode<synchronous>, transform_indices = @transform_0, window_bounds = array<i64: 36, 128>}, {pipeline_mode = #tpu.pipeline_mode<synchronous>, transform_indices = @transform_1, window_bounds = array<i64: 32, 128>}, {pipeline_mode = #tpu.pipeline_mode<synchronous>, transform_indices = @transform_2, window_bounds = array<i64: 32, 128>}, {pipeline_mode = #tpu.pipeline_mode<synchronous>, transform_indices = @transform_3, window_bounds = array<i64: 8, 128>}, {pipeline_mode = #tpu.pipeline_mode<synchronous>, transform_indices = @transform_4, window_bounds = array<i64: 24, 32>}]} {
    %c0 = arith.constant 0 : index
    %c0_0 = arith.constant 0 : index
    %0 = vector.load %arg2[%c0, %c0_0] : memref<36x128xf32, #tpu.memory_space<vmem>>, vector<36x32xf32>
    %c0_1 = arith.constant 0 : index
    %c32 = arith.constant 32 : index
    %1 = vector.load %arg2[%c0_1, %c32] : memref<36x128xf32, #tpu.memory_space<vmem>>, vector<36x32xf32>
    %2 = arith.fptosi %1 : vector<36x32xf32> to vector<36x32xi32>
    %c0_2 = arith.constant 0 : index
    %c64 = arith.constant 64 : index
    %3 = vector.load %arg2[%c0_2, %c64] : memref<36x128xf32, #tpu.memory_space<vmem>>, vector<32x32xf32>
    %c0_3 = arith.constant 0 : index
    %c0_4 = arith.constant 0 : index
    %4 = vector.load %arg3[%c0_3, %c0_4] : memref<32x128xf32, #tpu.memory_space<vmem>>, vector<32x96xf32>
    %c0_5 = arith.constant 0 : index
    %c96 = arith.constant 96 : index
    %5 = vector.load %arg3[%c0_5, %c96] : memref<32x128xf32, #tpu.memory_space<vmem>>, vector<32x32xf32>
    %c0_6 = arith.constant 0 : index
    %c0_7 = arith.constant 0 : index
    %6 = vector.load %arg4[%c0_6, %c0_7] : memref<32x128xf32, #tpu.memory_space<vmem>>, vector<32x64xf32>
    %c0_8 = arith.constant 0 : index
    %c64_9 = arith.constant 64 : index
    %7 = vector.load %arg4[%c0_8, %c64_9] : memref<32x128xf32, #tpu.memory_space<vmem>>, vector<32x64xf32>
    %c0_10 = arith.constant 0 : index
    %c0_11 = arith.constant 0 : index
    %8 = vector.load %arg5[%c0_10, %c0_11] : memref<8x128xf32, #tpu.memory_space<vmem>>, vector<1x96xf32>
    %c1 = arith.constant 1 : index
    %c0_12 = arith.constant 0 : index
    %9 = vector.load %arg5[%c1, %c0_12] : memref<8x128xf32, #tpu.memory_space<vmem>>, vector<1x64xf32>
    %c2 = arith.constant 2 : index
    %c0_13 = arith.constant 0 : index
    %10 = vector.load %arg5[%c2, %c0_13] : memref<8x128xf32, #tpu.memory_space<vmem>>, vector<1x32xf32>
    %c3 = arith.constant 3 : index
    %c0_14 = arith.constant 0 : index
    %11 = vector.load %arg5[%c3, %c0_14] : memref<8x128xf32, #tpu.memory_space<vmem>>, vector<1x32xf32>
    %c4 = arith.constant 4 : index
    %c0_15 = arith.constant 0 : index
    %12 = vector.load %arg5[%c4, %c0_15] : memref<8x128xf32, #tpu.memory_space<vmem>>, vector<1x32xf32>
    %c5 = arith.constant 5 : index
    %c0_16 = arith.constant 0 : index
    %13 = vector.load %arg5[%c5, %c0_16] : memref<8x128xf32, #tpu.memory_space<vmem>>, vector<1x32xf32>
    %c6 = arith.constant 6 : index
    %c0_17 = arith.constant 0 : index
    %14 = vector.load %arg5[%c6, %c0_17] : memref<8x128xf32, #tpu.memory_space<vmem>>, vector<1x32xf32>
    %c7 = arith.constant 7 : index
    %c0_18 = arith.constant 0 : index
    %15 = vector.load %arg5[%c7, %c0_18] : memref<8x128xf32, #tpu.memory_space<vmem>>, vector<1x32xf32>
    %16 = tpu.iota {dimensions = array<i32: 1>} : vector<36x32xi32>
    %17 = arith.cmpi eq, %2, %16 : vector<36x32xi32>
    %18 = arith.extui %17 : vector<36x32xi1> to vector<36x32xi32>
    %19 = arith.sitofp %18 : vector<36x32xi32> to vector<36x32xf32>
    %cst = arith.constant dense<0.000000e+00> : vector<36x32xf32>
    %20 = tpu.matmul %19, %3, %cst {dimension_numbers = #tpu.dot_dimension_numbers<[1], [0], [0], [1], [0, 0, 1, 1], [], []>} : vector<36x32xf32>, vector<32x32xf32>, vector<36x32xf32> -> vector<36x32xf32>
    %21 = arith.addf %20, %0 : vector<36x32xf32>
    %22 = tpu.iota {dimensions = array<i32: 0>} : vector<72x1xi32>
    %c36_i32 = arith.constant 36 : i32
    %23 = vector.broadcast %c36_i32 : i32 to vector<72x1xi32>
    %24 = arith.cmpi slt, %22, %23 : vector<72x1xi32>
    %c36_i32_19 = arith.constant 36 : i32
    %25 = vector.broadcast %c36_i32_19 : i32 to vector<72x1xi32>
    %26 = arith.subi %22, %25 : vector<72x1xi32>
    %27 = arith.select %24, %22, %26 : vector<72x1xi1>, vector<72x1xi32>
    %c0_i32 = arith.constant 0 : i32
    %28 = vector.broadcast %c0_i32 : i32 to vector<72x1xi32>
    %29 = tpu.iota {dimensions = array<i32: 1>} : vector<1x36xi32>
    %c0_i32_20 = arith.constant 0 : i32
    %30 = vector.broadcast %c0_i32_20 : i32 to vector<1x36xi32>
    %c12_i32 = arith.constant 12 : i32
    %31 = vector.broadcast %c12_i32 : i32 to vector<72x1xi32>
    %32 = arith.cmpi sge, %27, %31 : vector<72x1xi32>
    %33 = arith.extui %32 : vector<72x1xi1> to vector<72x1xi32>
    %34 = arith.addi %28, %33 : vector<72x1xi32>
    %c12_i32_21 = arith.constant 12 : i32
    %35 = vector.broadcast %c12_i32_21 : i32 to vector<1x36xi32>
    %36 = arith.cmpi sge, %29, %35 : vector<1x36xi32>
    %37 = arith.extui %36 : vector<1x36xi1> to vector<1x36xi32>
    %38 = arith.addi %30, %37 : vector<1x36xi32>
    %c24_i32 = arith.constant 24 : i32
    %39 = vector.broadcast %c24_i32 : i32 to vector<72x1xi32>
    %40 = arith.cmpi sge, %27, %39 : vector<72x1xi32>
    %41 = arith.extui %40 : vector<72x1xi1> to vector<72x1xi32>
    %42 = arith.addi %34, %41 : vector<72x1xi32>
    %c24_i32_22 = arith.constant 24 : i32
    %43 = vector.broadcast %c24_i32_22 : i32 to vector<1x36xi32>
    %44 = arith.cmpi sge, %29, %43 : vector<1x36xi32>
    %45 = arith.extui %44 : vector<1x36xi1> to vector<1x36xi32>
    %46 = arith.addi %38, %45 : vector<1x36xi32>
    %c12_i32_23 = arith.constant 12 : i32
    %47 = vector.broadcast %c12_i32_23 : i32 to vector<1x36xi32>
    %48 = arith.muli %46, %47 : vector<1x36xi32>
    %49 = arith.subi %29, %48 : vector<1x36xi32>
    %c0_i32_24 = arith.constant 0 : i32
    %50 = vector.broadcast %c0_i32_24 : i32 to vector<1x36xi32>
    %c0_i32_25 = arith.constant 0 : i32
    %51 = vector.broadcast %c0_i32_25 : i32 to vector<1x36xi32>
    %52 = arith.cmpi eq, %46, %51 : vector<1x36xi32>
    %c0_26 = arith.constant 0 : index
    %53 = memref.load %arg1[%c0_26] : memref<3xi32, #tpu.memory_space<smem>>
    %54 = vector.broadcast %53 : i32 to vector<1x36xi32>
    %55 = arith.select %52, %54, %50 : vector<1x36xi1>, vector<1x36xi32>
    %c1_i32 = arith.constant 1 : i32
    %56 = vector.broadcast %c1_i32 : i32 to vector<1x36xi32>
    %57 = arith.cmpi eq, %46, %56 : vector<1x36xi32>
    %c1_27 = arith.constant 1 : index
    %58 = memref.load %arg1[%c1_27] : memref<3xi32, #tpu.memory_space<smem>>
    %59 = vector.broadcast %58 : i32 to vector<1x36xi32>
    %60 = arith.select %57, %59, %55 : vector<1x36xi1>, vector<1x36xi32>
    %c2_i32 = arith.constant 2 : i32
    %61 = vector.broadcast %c2_i32 : i32 to vector<1x36xi32>
    %62 = arith.cmpi eq, %46, %61 : vector<1x36xi32>
    %c2_28 = arith.constant 2 : index
    %63 = memref.load %arg1[%c2_28] : memref<3xi32, #tpu.memory_space<smem>>
    %64 = vector.broadcast %63 : i32 to vector<1x36xi32>
    %65 = arith.select %62, %64, %60 : vector<1x36xi1>, vector<1x36xi32>
    %66 = vector.broadcast %42 : vector<72x1xi32> to vector<72x36xi32>
    %67 = vector.broadcast %46 : vector<1x36xi32> to vector<72x36xi32>
    %68 = arith.cmpi eq, %66, %67 : vector<72x36xi32>
    %69 = arith.cmpi slt, %49, %65 : vector<1x36xi32>
    %70 = vector.broadcast %69 : vector<1x36xi1> to vector<72x36xi1>
    %71 = arith.andi %68, %70 : vector<72x36xi1>
    %cst_29 = arith.constant 0.000000e+00 : f32
    %cst_30 = arith.constant -1.000000e+30 : f32
    %72 = vector.broadcast %cst_29 : f32 to vector<72x36xf32>
    %73 = vector.broadcast %cst_30 : f32 to vector<72x36xf32>
    %74 = arith.select %71, %72, %73 : vector<72x36xi1>, vector<72x36xf32>
    %cst_31 = arith.constant dense<0.000000e+00> : vector<36x96xf32>
    %75 = tpu.matmul %21, %4, %cst_31 {dimension_numbers = #tpu.dot_dimension_numbers<[1], [0], [0], [1], [0, 0, 1, 1], [], []>} : vector<36x32xf32>, vector<32x96xf32>, vector<36x96xf32> -> vector<36x96xf32>
    %76 = vector.broadcast %8 : vector<1x96xf32> to vector<36x96xf32>
    %77 = arith.addf %75, %76 : vector<36x96xf32>
    %78 = vector.extract_strided_slice %77 {offsets = [0, 0], sizes = [36, 32], strides = [1, 1]} : vector<36x96xf32> to vector<36x32xf32>
    %79 = vector.extract_strided_slice %77 {offsets = [0, 32], sizes = [36, 32], strides = [1, 1]} : vector<36x96xf32> to vector<36x32xf32>
    %80 = vector.extract_strided_slice %77 {offsets = [0, 64], sizes = [36, 32], strides = [1, 1]} : vector<36x96xf32> to vector<36x32xf32>
    %81 = tpu.iota {dimensions = array<i32: 1>} : vector<36x32xi32>
    %c16_i32 = arith.constant 16 : i32
    %82 = vector.broadcast %c16_i32 : i32 to vector<36x32xi32>
    %83 = arith.cmpi slt, %81, %82 : vector<36x32xi32>
    %cst_32 = arith.constant 0.000000e+00 : f32
    %84 = vector.broadcast %cst_32 : f32 to vector<36x32xf32>
    %85 = arith.select %83, %78, %84 : vector<36x32xi1>, vector<36x32xf32>
    %c16_i32_33 = arith.constant 16 : i32
    %86 = vector.broadcast %c16_i32_33 : i32 to vector<36x32xi32>
    %87 = arith.cmpi sge, %81, %86 : vector<36x32xi32>
    %cst_34 = arith.constant 0.000000e+00 : f32
    %88 = vector.broadcast %cst_34 : f32 to vector<36x32xf32>
    %89 = arith.select %87, %78, %88 : vector<36x32xi1>, vector<36x32xf32>
    %90 = tpu.concatenate %85, %89 in 0 : vector<36x32xf32>, vector<36x32xf32> -> vector<72x32xf32>
    %cst_35 = arith.constant dense<0.000000e+00> : vector<72x36xf32>
    %91 = tpu.matmul %90, %79, %cst_35 {dimension_numbers = #tpu.dot_dimension_numbers<[1], [1], [0], [0], [0, 0, 1, 0], [], []>} : vector<72x32xf32>, vector<36x32xf32>, vector<72x36xf32> -> vector<72x36xf32>
    %92 = arith.addf %91, %74 : vector<72x36xf32>
    %cst_36 = arith.constant dense<0xFF800000> : vector<72xf32>
    %93 = vector.multi_reduction <maximumf>, %92, %cst_36 [1] : vector<72x36xf32> to vector<72xf32>
    %94 = vector.shape_cast %93 : vector<72xf32> to vector<72x1xf32>
    %95 = vector.broadcast %94 : vector<72x1xf32> to vector<72x36xf32>
    %96 = arith.subf %92, %95 : vector<72x36xf32>
    %97 = math.exp %96 : vector<72x36xf32>
    %cst_37 = arith.constant dense<0.000000e+00> : vector<72xf32>
    %98 = vector.multi_reduction <add>, %97, %cst_37 [1] : vector<72x36xf32> to vector<72xf32>
    %99 = vector.shape_cast %98 : vector<72xf32> to vector<72x1xf32>
    %100 = vector.broadcast %99 : vector<72x1xf32> to vector<72x36xf32>
    %101 = arith.divf %97, %100 : vector<72x36xf32>
    %cst_38 = arith.constant dense<0.000000e+00> : vector<72x32xf32>
    %102 = tpu.matmul %101, %80, %cst_38 {dimension_numbers = #tpu.dot_dimension_numbers<[1], [0], [0], [1], [0, 0, 1, 1], [], []>} : vector<72x36xf32>, vector<36x32xf32>, vector<72x32xf32> -> vector<72x32xf32>
    %c16_i32_39 = arith.constant 16 : i32
    %103 = vector.broadcast %c16_i32_39 : i32 to vector<36x32xi32>
    %104 = arith.cmpi slt, %81, %103 : vector<36x32xi32>
    %105 = vector.extract_strided_slice %102 {offsets = [0, 0], sizes = [36, 32], strides = [1, 1]} : vector<72x32xf32> to vector<36x32xf32>
    %106 = vector.extract_strided_slice %102 {offsets = [36, 0], sizes = [36, 32], strides = [1, 1]} : vector<72x32xf32> to vector<36x32xf32>
    %107 = arith.select %104, %105, %106 : vector<36x32xi1>, vector<36x32xf32>
    %cst_40 = arith.constant dense<0.000000e+00> : vector<36x32xf32>
    %108 = tpu.matmul %107, %5, %cst_40 {dimension_numbers = #tpu.dot_dimension_numbers<[1], [0], [0], [1], [0, 0, 1, 1], [], []>} : vector<36x32xf32>, vector<32x32xf32>, vector<36x32xf32> -> vector<36x32xf32>
    %109 = vector.broadcast %10 : vector<1x32xf32> to vector<36x32xf32>
    %110 = arith.addf %108, %109 : vector<36x32xf32>
    %111 = arith.addf %21, %110 : vector<36x32xf32>
    %cst_41 = arith.constant dense<0.000000e+00> : vector<36xf32>
    %112 = vector.multi_reduction <add>, %111, %cst_41 [1] : vector<36x32xf32> to vector<36xf32>
    %113 = vector.shape_cast %112 : vector<36xf32> to vector<36x1xf32>
    %cst_42 = arith.constant 3.200000e+01 : f32
    %114 = vector.broadcast %cst_42 : f32 to vector<36x1xf32>
    %115 = arith.divf %113, %114 : vector<36x1xf32>
    %116 = vector.broadcast %115 : vector<36x1xf32> to vector<36x32xf32>
    %117 = arith.subf %111, %116 : vector<36x32xf32>
    %118 = arith.mulf %117, %117 : vector<36x32xf32>
    %cst_43 = arith.constant dense<0.000000e+00> : vector<36xf32>
    %119 = vector.multi_reduction <add>, %118, %cst_43 [1] : vector<36x32xf32> to vector<36xf32>
    %120 = vector.shape_cast %119 : vector<36xf32> to vector<36x1xf32>
    %cst_44 = arith.constant 3.200000e+01 : f32
    %121 = vector.broadcast %cst_44 : f32 to vector<36x1xf32>
    %122 = arith.divf %120, %121 : vector<36x1xf32>
    %123 = vector.broadcast %115 : vector<36x1xf32> to vector<36x32xf32>
    %124 = arith.subf %111, %123 : vector<36x32xf32>
    %cst_45 = arith.constant 9.99999996E-13 : f32
    %125 = vector.broadcast %cst_45 : f32 to vector<36x1xf32>
    %126 = arith.addf %122, %125 : vector<36x1xf32>
    %127 = math.rsqrt %126 : vector<36x1xf32>
    %128 = vector.broadcast %127 : vector<36x1xf32> to vector<36x32xf32>
    %129 = arith.mulf %124, %128 : vector<36x32xf32>
    %130 = vector.broadcast %11 : vector<1x32xf32> to vector<36x32xf32>
    %131 = arith.mulf %129, %130 : vector<36x32xf32>
    %132 = vector.broadcast %12 : vector<1x32xf32> to vector<36x32xf32>
    %133 = arith.addf %131, %132 : vector<36x32xf32>
    %cst_46 = arith.constant dense<0.000000e+00> : vector<36x64xf32>
    %134 = tpu.matmul %133, %6, %cst_46 {dimension_numbers = #tpu.dot_dimension_numbers<[1], [0], [0], [1], [0, 0, 1, 1], [], []>} : vector<36x32xf32>, vector<32x64xf32>, vector<36x64xf32> -> vector<36x64xf32>
    %135 = vector.broadcast %9 : vector<1x64xf32> to vector<36x64xf32>
    %136 = arith.addf %134, %135 : vector<36x64xf32>
    %cst_47 = arith.constant 5.000000e-01 : f32
    %137 = vector.broadcast %cst_47 : f32 to vector<36x64xf32>
    %138 = arith.mulf %137, %136 : vector<36x64xf32>
    %cst_48 = arith.constant 4.471500e-02 : f32
    %139 = vector.broadcast %cst_48 : f32 to vector<36x64xf32>
    %140 = arith.mulf %139, %136 : vector<36x64xf32>
    %141 = arith.mulf %140, %136 : vector<36x64xf32>
    %142 = arith.mulf %141, %136 : vector<36x64xf32>
    %143 = arith.addf %136, %142 : vector<36x64xf32>
    %cst_49 = arith.constant 0.797884583 : f32
    %144 = vector.broadcast %cst_49 : f32 to vector<36x64xf32>
    %145 = arith.mulf %144, %143 : vector<36x64xf32>
    %146 = math.tanh %145 : vector<36x64xf32>
    %cst_50 = arith.constant 1.000000e+00 : f32
    %147 = vector.broadcast %cst_50 : f32 to vector<36x64xf32>
    %148 = arith.addf %147, %146 : vector<36x64xf32>
    %149 = arith.mulf %138, %148 : vector<36x64xf32>
    %cst_51 = arith.constant dense<0.000000e+00> : vector<36x32xf32>
    %150 = tpu.matmul %149, %7, %cst_51 {dimension_numbers = #tpu.dot_dimension_numbers<[1], [1], [0], [0], [0, 0, 1, 0], [], []>} : vector<36x64xf32>, vector<32x64xf32>, vector<36x32xf32> -> vector<36x32xf32>
    %151 = vector.broadcast %13 : vector<1x32xf32> to vector<36x32xf32>
    %152 = arith.addf %150, %151 : vector<36x32xf32>
    %153 = arith.addf %133, %152 : vector<36x32xf32>
    %cst_52 = arith.constant dense<0.000000e+00> : vector<36xf32>
    %154 = vector.multi_reduction <add>, %153, %cst_52 [1] : vector<36x32xf32> to vector<36xf32>
    %155 = vector.shape_cast %154 : vector<36xf32> to vector<36x1xf32>
    %cst_53 = arith.constant 3.200000e+01 : f32
    %156 = vector.broadcast %cst_53 : f32 to vector<36x1xf32>
    %157 = arith.divf %155, %156 : vector<36x1xf32>
    %158 = vector.broadcast %157 : vector<36x1xf32> to vector<36x32xf32>
    %159 = arith.subf %153, %158 : vector<36x32xf32>
    %160 = arith.mulf %159, %159 : vector<36x32xf32>
    %cst_54 = arith.constant dense<0.000000e+00> : vector<36xf32>
    %161 = vector.multi_reduction <add>, %160, %cst_54 [1] : vector<36x32xf32> to vector<36xf32>
    %162 = vector.shape_cast %161 : vector<36xf32> to vector<36x1xf32>
    %cst_55 = arith.constant 3.200000e+01 : f32
    %163 = vector.broadcast %cst_55 : f32 to vector<36x1xf32>
    %164 = arith.divf %162, %163 : vector<36x1xf32>
    %165 = vector.broadcast %157 : vector<36x1xf32> to vector<36x32xf32>
    %166 = arith.subf %153, %165 : vector<36x32xf32>
    %cst_56 = arith.constant 9.99999996E-13 : f32
    %167 = vector.broadcast %cst_56 : f32 to vector<36x1xf32>
    %168 = arith.addf %164, %167 : vector<36x1xf32>
    %169 = math.rsqrt %168 : vector<36x1xf32>
    %170 = vector.broadcast %169 : vector<36x1xf32> to vector<36x32xf32>
    %171 = arith.mulf %166, %170 : vector<36x32xf32>
    %172 = vector.broadcast %14 : vector<1x32xf32> to vector<36x32xf32>
    %173 = arith.mulf %171, %172 : vector<36x32xf32>
    %174 = vector.broadcast %15 : vector<1x32xf32> to vector<36x32xf32>
    %175 = arith.addf %173, %174 : vector<36x32xf32>
    %176 = tpu.iota {dimensions = array<i32: 0>} : vector<8x1xi32>
    %177 = vector.extract_strided_slice %175 {offsets = [1, 0], sizes = [8, 32], strides = [1, 1]} : vector<36x32xf32> to vector<8x32xf32>
    %c0_57 = arith.constant 0 : index
    %178 = memref.load %arg1[%c0_57] : memref<3xi32, #tpu.memory_space<smem>>
    %c2_i32_58 = arith.constant 2 : i32
    %179 = arith.subi %178, %c2_i32_58 : i32
    %180 = vector.broadcast %179 : i32 to vector<8x1xi32>
    %181 = arith.cmpi slt, %176, %180 : vector<8x1xi32>
    %cst_59 = arith.constant 0.000000e+00 : f32
    %182 = vector.shape_cast %181 : vector<8x1xi1> to vector<8x1xi1>
    %183 = vector.broadcast %182 : vector<8x1xi1> to vector<8x32xi1>
    %184 = vector.broadcast %cst_59 : f32 to vector<8x32xf32>
    %185 = arith.select %183, %177, %184 : vector<8x32xi1>, vector<8x32xf32>
    %c0_60 = arith.constant 0 : index
    %c0_61 = arith.constant 0 : index
    %186 = vector.load %arg6[%c0_60, %c0_61] : memref<24x32xf32, #tpu.memory_space<vmem>>, vector<8x32xf32>
    tpu.vector_store %arg6[%c0_60, %c0_61], %185 {strides = array<i32>} : memref<24x32xf32, #tpu.memory_space<vmem>>, vector<8x32xf32>,
    %187 = vector.extract_strided_slice %175 {offsets = [13, 0], sizes = [8, 32], strides = [1, 1]} : vector<36x32xf32> to vector<8x32xf32>
    %c1_62 = arith.constant 1 : index
    %188 = memref.load %arg1[%c1_62] : memref<3xi32, #tpu.memory_space<smem>>
    %c2_i32_63 = arith.constant 2 : i32
    %189 = arith.subi %188, %c2_i32_63 : i32
    %190 = vector.broadcast %189 : i32 to vector<8x1xi32>
    %191 = arith.cmpi slt, %176, %190 : vector<8x1xi32>
    %cst_64 = arith.constant 0.000000e+00 : f32
    %192 = vector.shape_cast %191 : vector<8x1xi1> to vector<8x1xi1>
    %193 = vector.broadcast %192 : vector<8x1xi1> to vector<8x32xi1>
    %194 = vector.broadcast %cst_64 : f32 to vector<8x32xf32>
    %195 = arith.select %193, %187, %194 : vector<8x32xi1>, vector<8x32xf32>
    %c8 = arith.constant 8 : index
    %c0_65 = arith.constant 0 : index
    %196 = vector.load %arg6[%c8, %c0_65] : memref<24x32xf32, #tpu.memory_space<vmem>>, vector<8x32xf32>
    tpu.vector_store %arg6[%c8, %c0_65], %195 {strides = array<i32>} : memref<24x32xf32, #tpu.memory_space<vmem>>, vector<8x32xf32>,
    %197 = vector.extract_strided_slice %175 {offsets = [25, 0], sizes = [8, 32], strides = [1, 1]} : vector<36x32xf32> to vector<8x32xf32>
    %c2_66 = arith.constant 2 : index
    %198 = memref.load %arg1[%c2_66] : memref<3xi32, #tpu.memory_space<smem>>
    %c2_i32_67 = arith.constant 2 : i32
    %199 = arith.subi %198, %c2_i32_67 : i32
    %200 = vector.broadcast %199 : i32 to vector<8x1xi32>
    %201 = arith.cmpi slt, %176, %200 : vector<8x1xi32>
    %cst_68 = arith.constant 0.000000e+00 : f32
    %202 = vector.shape_cast %201 : vector<8x1xi1> to vector<8x1xi1>
    %203 = vector.broadcast %202 : vector<8x1xi1> to vector<8x32xi1>
    %204 = vector.broadcast %cst_68 : f32 to vector<8x32xf32>
    %205 = arith.select %203, %197, %204 : vector<8x32xi1>, vector<8x32xf32>
    %c16 = arith.constant 16 : index
    %c0_69 = arith.constant 0 : index
    %206 = vector.load %arg6[%c16, %c0_69] : memref<24x32xf32, #tpu.memory_space<vmem>>, vector<8x32xf32>
    tpu.vector_store %arg6[%c16, %c0_69], %205 {strides = array<i32>} : memref<24x32xf32, #tpu.memory_space<vmem>>, vector<8x32xf32>,
    return
  }
  func.func @transform_0(%arg0: i32, %arg1: memref<3xi32, #tpu.memory_space<smem>>) -> (i32, i32) {
    %c0_i32 = arith.constant 0 : i32
    %c0_i32_0 = arith.constant 0 : i32
    %c0_i32_1 = arith.constant 0 : i32
    return %c0_i32, %c0_i32_0 : i32, i32
  }
  func.func @transform_1(%arg0: i32, %arg1: memref<3xi32, #tpu.memory_space<smem>>) -> (i32, i32) {
    %c0_i32 = arith.constant 0 : i32
    %c0_i32_0 = arith.constant 0 : i32
    %c0_i32_1 = arith.constant 0 : i32
    return %c0_i32, %c0_i32_0 : i32, i32
  }
  func.func @transform_2(%arg0: i32, %arg1: memref<3xi32, #tpu.memory_space<smem>>) -> (i32, i32) {
    %c0_i32 = arith.constant 0 : i32
    %c0_i32_0 = arith.constant 0 : i32
    %c0_i32_1 = arith.constant 0 : i32
    return %c0_i32, %c0_i32_0 : i32, i32
  }
  func.func @transform_3(%arg0: i32, %arg1: memref<3xi32, #tpu.memory_space<smem>>) -> (i32, i32) {
    %c0_i32 = arith.constant 0 : i32
    %c0_i32_0 = arith.constant 0 : i32
    %c0_i32_1 = arith.constant 0 : i32
    return %c0_i32, %c0_i32_0 : i32, i32
  }
  func.func @transform_4(%arg0: i32, %arg1: memref<3xi32, #tpu.memory_space<smem>>) -> (i32, i32) {
    %c0_i32 = arith.constant 0 : i32
    %c0_i32_0 = arith.constant 0 : i32
    %c0_i32_1 = arith.constant 0 : i32
    return %c0_i32, %c0_i32_0 : i32, i32
  }
}

</mosaic_0001>

<llo_original>
// kernel: tpu_custom_call.1
$region0: #{tpu_custom_call.1}
  #allocation0 [shape = 'u32[]', space=smem, size = 0x4, offset = 0x4, fixed_abs, tag = 'smem constant byte address 0x4 - core index']
  #allocation1 [shape = 'u32[144,128]{1,0:T(1,128)}', space=vmem, size = 0x12000, scoped, tag = 'internal scratch']
  #allocation2 [shape = 's32[1]{0}', space=sflag, size = 0x4, scoped, tag = 'scoped memory for tpu_custom_call.1']
  #allocation3 [shape = 'u8[512]{0}', space=smem, size = 0x200, scoped, tag = 'prefetched SMEM operand 0']
  %s0 = inlined_call_operand.hbm [shape: s32[3], index: 0, kind: input, shape index: {}]
  %s1 = inlined_call_operand.hbm [shape: f32[36,128], index: 1, kind: input, shape index: {}]
  %s2 = inlined_call_operand.hbm [shape: f32[32,128], index: 2, kind: input, shape index: {}]
  %s3 = inlined_call_operand.hbm [shape: f32[32,128], index: 3, kind: input, shape index: {}]
  %s4 = inlined_call_operand.hbm [shape: f32[8,128], index: 4, kind: input, shape index: {}]
  %s5 = inlined_call_operand.hbm [shape: f32[24,32], index: 5, kind: output, shape index: {}]
  %s6 = sld [smem:[#allocation0]]
  $region42: #{tpu_custom_call.1} parent=0
    _
  %s8 = ssub.s32 1, %s6
  %s9 = scalar_select 0, %s8, %s6
  %11 = dma.hbm_to_smem %s0, 16, [#allocation3], [#allocation2]
  %12 = dma.done [#allocation2], 16
  %13 = sfence
  $region1: #{tpu_custom_call.1} parent=0
    #allocation4 [shape = 'u8[20480]{0}', space=vmem, size = 0x5000, scoped, tag = 'input window, operand 1, single buffered']
    #allocation5 [shape = 's32[1]{0}', space=sflag, size = 0x4, scoped, tag = 'scoped memory for tpu_custom_call.1']
    #allocation6 [shape = 's32[1]{0}', space=sflag, size = 0x4, scoped, tag = 'scoped memory for tpu_custom_call.1']
    #allocation7 [shape = 'u8[16384]{0}', space=vmem, size = 0x4000, scoped, tag = 'input window, operand 2, single buffered']
    #allocation8 [shape = 's32[1]{0}', space=sflag, size = 0x4, scoped, tag = 'scoped memory for tpu_custom_call.1']
    #allocation9 [shape = 'u8[16384]{0}', space=vmem, size = 0x4000, scoped, tag = 'input window, operand 3, single buffered']
    #allocation10 [shape = 'u8[4096]{0}', space=vmem, size = 0x1000, scoped, tag = 'input window, operand 4, single buffered']
    #allocation11 [shape = 's32[1]{0}', space=sflag, size = 0x4, scoped, tag = 'scoped memory for tpu_custom_call.1']
    #allocation12 [shape = 'u8[12288]{0}', space=vmem, size = 0x3000, scoped, tag = 'output window, operand 0, single buffered']
    %14 = vsyncpa [#allocation5], 0
    %15 = vsyncpa [#allocation8], 0
    %16 = vsyncpa [#allocation11], 0
    %17 = vsyncpa [#allocation6], 0
    // Predicated region
    $region2: #{tpu_custom_call.1} parent=1 // pred_check
      _
    $region3: #{tpu_custom_call.1} parent=1 // pred_check_branch
      %19 = sbr.rel (0) target = $region5
    $region4: #{tpu_custom_call.1} parent=1 // pred_region
      %s21 = ssub.s32 640, 640
      %22 = vsyncadd [#allocation5], %s21
      %s23 = sshll.u32 [#allocation4], 4
      %s24 = int_to_ptr.vmem [resolvable:$true] %s23
      %29 = dma.hbm_to_vmem [thread:$0]  %s1, 640, %s24, [#allocation5], 128, 128, 8
    $region5: #{tpu_custom_call.1} parent=1 // pred_fallthru
      _
    // Predicated region
    $region6: #{tpu_custom_call.1} parent=1 // pred_check
      _
    $region7: #{tpu_custom_call.1} parent=1 // pred_check_branch
      %31 = sbr.rel (0) target = $region9
    $region8: #{tpu_custom_call.1} parent=1 // pred_region
      %s33 = ssub.s32 512, 512
      %34 = vsyncadd [#allocation8], %s33
      %s35 = sshll.u32 [#allocation7], 4
      %s36 = int_to_ptr.vmem [resolvable:$true] %s35
      %41 = dma.hbm_to_vmem [thread:$0]  %s2, 512, %s36, [#allocation8], 128, 128, 8
    $region9: #{tpu_custom_call.1} parent=1 // pred_fallthru
      _
    // Predicated region
    $region10: #{tpu_custom_call.1} parent=1 // pred_check
      _
    $region11: #{tpu_custom_call.1} parent=1 // pred_check_branch
      %43 = sbr.rel (0) target = $region13
    $region12: #{tpu_custom_call.1} parent=1 // pred_region
      %s45 = ssub.s32 512, 512
      %46 = vsyncadd [#allocation8], %s45
      %s47 = sshll.u32 [#allocation9], 4
      %s48 = int_to_ptr.vmem [resolvable:$true] %s47
      %53 = dma.hbm_to_vmem [thread:$0]  %s3, 512, %s48, [#allocation8], 128, 128, 8
    $region13: #{tpu_custom_call.1} parent=1 // pred_fallthru
      _
    // Predicated region
    $region14: #{tpu_custom_call.1} parent=1 // pred_check
      _
    $region15: #{tpu_custom_call.1} parent=1 // pred_check_branch
      %55 = sbr.rel (0) target = $region17
    $region16: #{tpu_custom_call.1} parent=1 // pred_region
      %s57 = ssub.s32 128, 128
      %58 = vsyncadd [#allocation11], %s57
      %s60 = sshll.u32 [#allocation10], 4
      %s61 = int_to_ptr.vmem [resolvable:$true] %s60
      %63 = dma.hbm_to_vmem [thread:$0]  %s4, 128, %s61, [#allocation11]
    $region17: #{tpu_custom_call.1} parent=1 // pred_fallthru
      _
    // Predicated region
    $region18: #{tpu_custom_call.1} parent=1 // pred_check
      _
    $region19: #{tpu_custom_call.1} parent=1 // pred_check_branch
      %65 = sbr.rel (0) target = $region21
    $region20: #{tpu_custom_call.1} parent=1 // pred_region
      %66 = dma.done [#allocation5], 640
    $region21: #{tpu_custom_call.1} parent=1 // pred_fallthru
      _
    // Predicated region
    $region22: #{tpu_custom_call.1} parent=1 // pred_check
      _
    $region23: #{tpu_custom_call.1} parent=1 // pred_check_branch
      %68 = sbr.rel (0) target = $region25
    $region24: #{tpu_custom_call.1} parent=1 // pred_region
      %69 = dma.done [#allocation8], 512
    $region25: #{tpu_custom_call.1} parent=1 // pred_fallthru
      _
    // Predicated region
    $region26: #{tpu_custom_call.1} parent=1 // pred_check
      _
    $region27: #{tpu_custom_call.1} parent=1 // pred_check_branch
      %71 = sbr.rel (0) target = $region29
    $region28: #{tpu_custom_call.1} parent=1 // pred_region
      %72 = dma.done [#allocation8], 512
    $region29: #{tpu_custom_call.1} parent=1 // pred_fallthru
      _
    // Predicated region
    $region30: #{tpu_custom_call.1} parent=1 // pred_check
      _
    $region31: #{tpu_custom_call.1} parent=1 // pred_check_branch
      %74 = sbr.rel (0) target = $region33
    $region32: #{tpu_custom_call.1} parent=1 // pred_region
      %75 = dma.done [#allocation11], 128
    $region33: #{tpu_custom_call.1} parent=1 // pred_fallthru
      _
    %v76 = vld [vmem:[#allocation4] sm:$0xff]
    %v77 = vld [vmem:[#allocation4 + $0x8] sm:$0xff]
    %v78 = vld [vmem:[#allocation4 + $0x10] sm:$0xff]
    %v79 = vld [vmem:[#allocation4 + $0x18] sm:$0xff]
    %v80 = vld [vmem:[#allocation4 + $0x20] sm:$0xf]
    %v81 = vcvt.f32.s32.to.zero.pseudo %v76
    %v82 = vcvt.f32.s32.to.zero.pseudo %v77
    %v83 = vcvt.f32.s32.to.zero.pseudo %v78
    %v84 = vcvt.f32.s32.to.zero.pseudo %v79
    %v85 = vcvt.f32.s32.to.zero.pseudo %v80
    %v86 = vld [vmem:[#allocation4] sm:$0xff]
    %v87 = vld [vmem:[#allocation4 + $0x8] sm:$0xff]
    %v88 = vld [vmem:[#allocation4 + $0x10] sm:$0xff]
    %v89 = vld [vmem:[#allocation4 + $0x18] sm:$0xff]
    %v90 = vld [vmem:[#allocation7] sm:$0xff]
    %v91 = vld [vmem:[#allocation7 + $0x8] sm:$0xff]
    %v92 = vld [vmem:[#allocation7 + $0x10] sm:$0xff]
    %v93 = vld [vmem:[#allocation7 + $0x18] sm:$0xff]
    %v94 = vld [vmem:[#allocation9] sm:$0xff]
    %v95 = vld [vmem:[#allocation9 + $0x8] sm:$0xff]
    %v96 = vld [vmem:[#allocation9 + $0x10] sm:$0xff]
    %v97 = vld [vmem:[#allocation9 + $0x18] sm:$0xff]
    %v98 = vld [vmem:[#allocation10] sm:$0x1]
    %v99 = vld [vmem:[#allocation10 + $0x1] sm:$0x1]
    %v100 = vld [vmem:[#allocation10 + $0x2] sm:$0x1]
    %v101 = vld [vmem:[#allocation10 + $0x3] sm:$0x1]
    %v102 = vld [vmem:[#allocation10 + $0x4] sm:$0x1]
    %v103 = vld [vmem:[#allocation10 + $0x5] sm:$0x1]
    %v104 = vld [vmem:[#allocation10 + $0x6] sm:$0x1]
    %v105 = vld [vmem:[#allocation10 + $0x7] sm:$0x1]
    %v106 = vlaneseq
    %v107 = vand.u32 %v106, 127
    %108 = vrot.lane.b32.xlu0 %v107, 32
    %v109 = vpop.permute.xlu0 %108
    %vm110 = vcmp.eq.s32.totalorder %v81, %v109
    %vm111 = vcmp.eq.s32.totalorder %v82, %v109
    %vm112 = vcmp.eq.s32.totalorder %v83, %v109
    %vm113 = vcmp.eq.s32.totalorder %v84, %v109
    %vm114 = vcmp.eq.s32.totalorder %v85, %v109
    %v115 = vsel %vm110, 1, 0
    %v116 = vsel %vm111, 1, 0
    %v117 = vsel %vm112, 1, 0
    %v118 = vsel %vm113, 1, 0
    %v119 = vsel %vm114, 1, 0
    %v120 = vcvt.s32.f32 %v115
    %v121 = vcvt.s32.f32 %v116
    %v122 = vcvt.s32.f32 %v117
    %v123 = vcvt.s32.f32 %v118
    %v124 = vcvt.s32.f32 %v119
    %130 = vrot.lane.b32.xlu0 %v120, 96
    %v131 = vpop.permute.xlu0 %130
    %132 = vrot.lane.b32.xlu0 %v121, 96
    %v133 = vpop.permute.xlu0 %132
    %134 = vrot.lane.b32.xlu0 %v122, 96
    %v135 = vpop.permute.xlu0 %134
    %136 = vrot.lane.b32.xlu0 %v123, 96
    %v137 = vpop.permute.xlu0 %136
    %138 = vrot.lane.b32.xlu0 %v124, 96
    %v139 = vpop.permute.xlu0 %138
    %144 = vrot.lane.b32.xlu0 %v86, 64
    %v145 = vpop.permute.xlu0 %144
    %146 = vrot.lane.b32.xlu0 %v87, 64
    %v147 = vpop.permute.xlu0 %146
    %148 = vrot.lane.b32.xlu0 %v88, 64
    %v149 = vpop.permute.xlu0 %148
    %150 = vrot.lane.b32.xlu0 %v89, 64
    %v151 = vpop.permute.xlu0 %150
    %vm156 = vcmask 261120
    %v157 = vsel %vm156, %v131, 0
    %v159 = vsel %vm156, %v133, 0
    %v161 = vsel %vm156, %v135, 0
    %v163 = vsel %vm156, %v137, 0
    %v165 = vsel %vm156, %v139, 0
    %167 = vmatprep.subr.mxu0 0.0
    %168 = vmatpush1.msra.mxu0 0.0
    %169 = vmatprep.subr.mxu0 0.0
    %170 = vmatpush1.msra.mxu0 0.0
    %171 = vmatprep.subr.mxu0 0.0
    %172 = vmatpush1.msra.mxu0 0.0
    %173 = vmatprep.subr.mxu0 0.0
    %174 = vmatpush1.msra.mxu0 0.0
    %175 = vmatprep.subr.mxu0 0.0
    %176 = vmatpush1.msra.mxu0 0.0
    %177 = vmatprep.subr.mxu0 0.0
    %178 = vmatpush1.msra.mxu0 0.0
    %179 = vmatprep.subr.mxu0 0.0
    %180 = vmatpush1.msra.mxu0 0.0
    %181 = vmatprep.subr.mxu0 0.0
    %182 = vmatpush1.msra.mxu0 0.0
    %183 = vmatprep.subr.mxu0 0.0
    %184 = vmatpush1.msra.mxu0 0.0
    %185 = vmatprep.subr.mxu0 0.0
    %186 = vmatpush1.msra.mxu0 0.0
    %187 = vmatprep.subr.mxu0 0.0
    %188 = vmatpush1.msra.mxu0 0.0
    %189 = vmatprep.subr.mxu0 0.0
    %190 = vmatpush1.msra.mxu0 0.0
    %191 = vmatprep.subr.mxu0 0.0
    %192 = vmatpush1.msra.mxu0 %v151
    %193 = vmatprep.subr.mxu0 0.0
    %194 = vmatpush1.msra.mxu0 %v149
    %195 = vmatprep.subr.mxu0 0.0
    %196 = vmatpush1.msra.mxu0 %v147
    %197 = vmatprep.subr.mxu0 0.0
    %198 = vmatpush1.msra.mxu0 %v145
    %199 = vmatprep.subr.mxu0 0.0
    %200 = vmatpush2.msra.mxu0 0.0
    %201 = vmatprep.subr.mxu0 0.0
    %202 = vmatpush2.msra.mxu0 0.0
    %203 = vmatprep.subr.mxu0 0.0
    %204 = vmatpush2.msra.mxu0 0.0
    %205 = vmatprep.subr.mxu0 0.0
    %206 = vmatpush2.msra.mxu0 0.0
    %207 = vmatprep.subr.mxu0 0.0
    %208 = vmatpush2.msra.mxu0 0.0
    %209 = vmatprep.subr.mxu0 0.0
    %210 = vmatpush2.msra.mxu0 0.0
    %211 = vmatprep.subr.mxu0 0.0
    %212 = vmatpush2.msra.mxu0 0.0
    %213 = vmatprep.subr.mxu0 0.0
    %214 = vmatpush2.msra.mxu0 0.0
    %215 = vmatprep.subr.mxu0 0.0
    %216 = vmatpush2.msra.mxu0 0.0
    %217 = vmatprep.subr.mxu0 0.0
    %218 = vmatpush2.msra.mxu0 0.0
    %219 = vmatprep.subr.mxu0 0.0
    %220 = vmatpush2.msra.mxu0 0.0
    %221 = vmatprep.subr.mxu0 0.0
    %222 = vmatpush2.msra.mxu0 0.0
    %223 = vmatprep.subr.mxu0 0.0
    %224 = vmatpush2.msra.mxu0 0.0
    %225 = vmatprep.subr.mxu0 0.0
    %226 = vmatpush2.msra.mxu0 0.0
    %227 = vmatprep.subr.mxu0 0.0
    %228 = vmatpush2.msra.mxu0 0.0
    %229 = vmatprep.subr.mxu0 0.0
    %230 = vmatpush2.msra.mxu0 0.0
    %231 = vmatprep.mubr.f32.mxu0 0.0
    %232 = vmatmul.mubr.f32.gmra.mxu0 %v157
    %v233 = vpop.f32.mrf.mxu0
    %v234 = vadd.f32 %v76, %v233
    %v235 = vpop.f32.mrf.mxu0
    %236 = vmatprep.mubr.f32.mxu0 0.0
    %237 = vmatmul.mubr.f32.gmra.mxu0 %v159
    %v238 = vpop.f32.mrf.mxu0
    %v239 = vadd.f32 %v77, %v238
    %v240 = vpop.f32.mrf.mxu0
    %241 = vmatprep.mubr.f32.mxu0 0.0
    %242 = vmatmul.mubr.f32.gmra.mxu0 %v161
    %v243 = vpop.f32.mrf.mxu0
    %v244 = vadd.f32 %v78, %v243
    %v245 = vpop.f32.mrf.mxu0
    %246 = vmatprep.mubr.f32.mxu0 0.0
    %247 = vmatmul.mubr.f32.gmra.mxu0 %v163
    %v248 = vpop.f32.mrf.mxu0
    %v249 = vadd.f32 %v79, %v248
    %v250 = vpop.f32.mrf.mxu0
    %251 = vmatprep.mubr.f32.mxu0 0.0
    %252 = vmatmul.mubr.f32.gmra.mxu0 %v165
    %v253 = vpop.f32.mrf.mxu0
    %v254 = vadd.f32 %v80, %v253
    %v255 = vpop.f32.mrf.mxu0
    %256 = vdwg.mxu0
    %v257 = vlaneseq
    %v258 = vshrl.u32 %v257, 7
    %v259 = vadd.s32 %v258, 8
    %v260 = vadd.s32 %v258, 16
    %v261 = vadd.s32 %v258, 24
    %v262 = vadd.s32 %v258, 32
    %v263 = vadd.s32 %v258, 40
    %v264 = vadd.s32 %v258, 48
    %v265 = vadd.s32 %v258, 56
    %v266 = vadd.s32 %v258, 64
    %vm267 = vcmp.lt.s32.totalorder %v258, 36
    %vm268 = vcmp.lt.s32.totalorder %v259, 36
    %vm269 = vcmp.lt.s32.totalorder %v260, 36
    %vm270 = vcmp.lt.s32.totalorder %v261, 36
    %vm271 = vcmp.lt.s32.totalorder %v262, 36
    %vm272 = vcmp.lt.s32.totalorder %v263, 36
    %vm273 = vcmp.lt.s32.totalorder %v264, 36
    %vm274 = vcmp.lt.s32.totalorder %v265, 36
    %vm275 = vcmp.lt.s32.totalorder %v266, 36
    %v276 = vsub.s32 %v258, 36
    %v277 = vsub.s32 %v259, 36
    %v278 = vsub.s32 %v260, 36
    %v279 = vsub.s32 %v261, 36
    %v280 = vsub.s32 %v262, 36
    %v281 = vsub.s32 %v263, 36
    %v282 = vsub.s32 %v264, 36
    %v283 = vsub.s32 %v265, 36
    %v284 = vsub.s32 %v266, 36
    %v285 = vsel %vm267, %v258, %v276
    %v286 = vsel %vm268, %v259, %v277
    %v287 = vsel %vm269, %v260, %v278
    %v288 = vsel %vm270, %v261, %v279
    %v289 = vsel %vm271, %v262, %v280
    %v290 = vsel %vm272, %v263, %v281
    %v291 = vsel %vm273, %v264, %v282
    %v292 = vsel %vm274, %v265, %v283
    %v293 = vsel %vm275, %v266, %v284
    %vm294 = vcmp.ge.s32.totalorder %v285, 12
    %vm295 = vcmp.ge.s32.totalorder %v286, 12
    %vm296 = vcmp.ge.s32.totalorder %v287, 12
    %vm297 = vcmp.ge.s32.totalorder %v288, 12
    %vm298 = vcmp.ge.s32.totalorder %v289, 12
    %vm299 = vcmp.ge.s32.totalorder %v290, 12
    %vm300 = vcmp.ge.s32.totalorder %v291, 12
    %vm301 = vcmp.ge.s32.totalorder %v292, 12
    %vm302 = vcmp.ge.s32.totalorder %v293, 12
    %v303 = vsel %vm294, 1, 0
    %v304 = vsel %vm295, 1, 0
    %v305 = vsel %vm296, 1, 0
    %v306 = vsel %vm297, 1, 0
    %v307 = vsel %vm298, 1, 0
    %v308 = vsel %vm299, 1, 0
    %v309 = vsel %vm300, 1, 0
    %v310 = vsel %vm301, 1, 0
    %v311 = vsel %vm302, 1, 0
    %vm312 = vcmp.ge.s32.totalorder %v107, 12
    %v313 = vsel %vm312, 1, 0
    %vm314 = vcmp.ge.s32.totalorder %v285, 24
    %vm315 = vcmp.ge.s32.totalorder %v286, 24
    %vm316 = vcmp.ge.s32.totalorder %v287, 24
    %vm317 = vcmp.ge.s32.totalorder %v288, 24
    %vm318 = vcmp.ge.s32.totalorder %v289, 24
    %vm319 = vcmp.ge.s32.totalorder %v290, 24
    %vm320 = vcmp.ge.s32.totalorder %v291, 24
    %vm321 = vcmp.ge.s32.totalorder %v292, 24
    %vm322 = vcmp.ge.s32.totalorder %v293, 24
    %v323 = vsel %vm314, 1, 0
    %v324 = vsel %vm315, 1, 0
    %v325 = vsel %vm316, 1, 0
    %v326 = vsel %vm317, 1, 0
    %v327 = vsel %vm318, 1, 0
    %v328 = vsel %vm319, 1, 0
    %v329 = vsel %vm320, 1, 0
    %v330 = vsel %vm321, 1, 0
    %v331 = vsel %vm322, 1, 0
    %v332 = vadd.s32 %v303, %v323
    %v333 = vadd.s32 %v304, %v324
    %v334 = vadd.s32 %v305, %v325
    %v335 = vadd.s32 %v306, %v326
    %v336 = vadd.s32 %v307, %v327
    %v337 = vadd.s32 %v308, %v328
    %v338 = vadd.s32 %v309, %v329
    %v339 = vadd.s32 %v310, %v330
    %v340 = vadd.s32 %v311, %v331
    %vm341 = vcmp.ge.s32.totalorder %v107, 24
    %v342 = vsel %vm341, 1, 0
    %v343 = vadd.s32 %v313, %v342
    %v344 = vmul.u32 %v343, 12
    %v345 = vsub.s32 %v107, %v344
    %vm346 = vcmp.eq.s32.totalorder %v343, 0
    %s347 = sld [smem:[#allocation3]]
    %v348 = vstv %s347
    %v349 = vsel %vm346, %v348, 0
    %vm350 = vcmp.eq.s32.totalorder %v343, 1
    %s351 = sld [smem:[#allocation3 + $0x1]]
    %v352 = vstv %s351
    %v353 = vsel %vm350, %v352, %v349
    %vm354 = vcmp.eq.s32.totalorder %v343, 2
    %s355 = sld [smem:[#allocation3 + $0x2]]
    %v356 = vstv %s355
    %v357 = vsel %vm354, %v356, %v353
    %vm358 = vcmp.eq.s32.totalorder %v332, %v343
    %vm359 = vcmp.eq.s32.totalorder %v333, %v343
    %vm360 = vcmp.eq.s32.totalorder %v334, %v343
    %vm361 = vcmp.eq.s32.totalorder %v335, %v343
    %vm362 = vcmp.eq.s32.totalorder %v336, %v343
    %vm363 = vcmp.eq.s32.totalorder %v337, %v343
    %vm364 = vcmp.eq.s32.totalorder %v338, %v343
    %vm365 = vcmp.eq.s32.totalorder %v339, %v343
    %vm366 = vcmp.eq.s32.totalorder %v340, %v343
    %vm367 = vcmp.lt.s32.totalorder %v345, %v357
    %v368 = vsel %vm367, 1, 0
    %vm369 = vcmp.eq.s32.totalorder %v368, 1
    %vm370 = vmand %vm358, %vm369
    %vm371 = vmand %vm359, %vm369
    %vm372 = vmand %vm360, %vm369
    %vm373 = vmand %vm361, %vm369
    %vm374 = vmand %vm362, %vm369
    %vm375 = vmand %vm363, %vm369
    %vm376 = vmand %vm364, %vm369
    %vm377 = vmand %vm365, %vm369
    %vm378 = vmand %vm366, %vm369
    %v379 = vsel %vm370, 0.0, -1e+30
    %v380 = vsel %vm371, 0.0, -1e+30
    %v381 = vsel %vm372, 0.0, -1e+30
    %v382 = vsel %vm373, 0.0, -1e+30
    %v383 = vsel %vm374, 0.0, -1e+30
    %v384 = vsel %vm375, 0.0, -1e+30
    %v385 = vsel %vm376, 0.0, -1e+30
    %v386 = vsel %vm377, 0.0, -1e+30
    %v387 = vsel %vm378, 0.0, -1e+30
    %v388 = vlaneseq
    %v389 = vshrl.u32 %v388, 7
    %v390 = vsub.s32 0, %v389
    %v391 = vrot.slane %v98, %v390
    %v393 = vsel %vm156, %v234, 0
    %v396 = vsel %vm156, %v239, 0
    %v399 = vsel %vm156, %v244, 0
    %v402 = vsel %vm156, %v249, 0
    %v405 = vsel %vm156, %v254, 0
    %407 = vmatprep.subr.mxu0 0.0
    %408 = vmatpush1.msra.mxu0 0.0
    %409 = vmatprep.subr.mxu0 0.0
    %410 = vmatpush1.msra.mxu0 0.0
    %411 = vmatprep.subr.mxu0 0.0
    %412 = vmatpush1.msra.mxu0 0.0
    %413 = vmatprep.subr.mxu0 0.0
    %414 = vmatpush1.msra.mxu0 0.0
    %415 = vmatprep.subr.mxu0 0.0
    %416 = vmatpush1.msra.mxu0 0.0
    %417 = vmatprep.subr.mxu0 0.0
    %418 = vmatpush1.msra.mxu0 0.0
    %419 = vmatprep.subr.mxu0 0.0
    %420 = vmatpush1.msra.mxu0 0.0
    %421 = vmatprep.subr.mxu0 0.0
    %422 = vmatpush1.msra.mxu0 0.0
    %423 = vmatprep.subr.mxu0 0.0
    %424 = vmatpush1.msra.mxu0 0.0
    %425 = vmatprep.subr.mxu0 0.0
    %426 = vmatpush1.msra.mxu0 0.0
    %427 = vmatprep.subr.mxu0 0.0
    %428 = vmatpush1.msra.mxu0 0.0
    %429 = vmatprep.subr.mxu0 0.0
    %430 = vmatpush1.msra.mxu0 0.0
    %431 = vmatprep.subr.mxu0 0.0
    %432 = vmatpush1.msra.mxu0 %v93
    %433 = vmatprep.subr.mxu0 0.0
    %434 = vmatpush1.msra.mxu0 %v92
    %435 = vmatprep.subr.mxu0 0.0
    %436 = vmatpush1.msra.mxu0 %v91
    %437 = vmatprep.subr.mxu0 0.0
    %438 = vmatpush1.msra.mxu0 %v90
    %439 = vmatprep.subr.mxu0 0.0
    %440 = vmatpush2.msra.mxu0 0.0
    %441 = vmatprep.subr.mxu0 0.0
    %442 = vmatpush2.msra.mxu0 0.0
    %443 = vmatprep.subr.mxu0 0.0
    %444 = vmatpush2.msra.mxu0 0.0
    %445 = vmatprep.subr.mxu0 0.0
    %446 = vmatpush2.msra.mxu0 0.0
    %447 = vmatprep.subr.mxu0 0.0
    %448 = vmatpush2.msra.mxu0 0.0
    %449 = vmatprep.subr.mxu0 0.0
    %450 = vmatpush2.msra.mxu0 0.0
    %451 = vmatprep.subr.mxu0 0.0
    %452 = vmatpush2.msra.mxu0 0.0
    %453 = vmatprep.subr.mxu0 0.0
    %454 = vmatpush2.msra.mxu0 0.0
    %455 = vmatprep.subr.mxu0 0.0
    %456 = vmatpush2.msra.mxu0 0.0
    %457 = vmatprep.subr.mxu0 0.0
    %458 = vmatpush2.msra.mxu0 0.0
    %459 = vmatprep.subr.mxu0 0.0
    %460 = vmatpush2.msra.mxu0 0.0
    %461 = vmatprep.subr.mxu0 0.0
    %462 = vmatpush2.msra.mxu0 0.0
    %463 = vmatprep.subr.mxu0 0.0
    %464 = vmatpush2.msra.mxu0 0.0
    %465 = vmatprep.subr.mxu0 0.0
    %466 = vmatpush2.msra.mxu0 0.0
    %467 = vmatprep.subr.mxu0 0.0
    %468 = vmatpush2.msra.mxu0 0.0
    %469 = vmatprep.subr.mxu0 0.0
    %470 = vmatpush2.msra.mxu0 0.0
    %471 = vmatprep.mubr.f32.mxu0 0.0
    %472 = vmatmul.mubr.f32.gmra.mxu0 %v393
    %v473 = vpop.f32.mrf.mxu0
    %v474 = vadd.f32 %v391, %v473
    %v475 = vpop.f32.mrf.mxu0
    %476 = vmatprep.mubr.f32.mxu0 0.0
    %477 = vmatmul.mubr.f32.gmra.mxu0 %v396
    %v478 = vpop.f32.mrf.mxu0
    %v479 = vadd.f32 %v391, %v478
    %v480 = vpop.f32.mrf.mxu0
    %481 = vmatprep.mubr.f32.mxu0 0.0
    %482 = vmatmul.mubr.f32.gmra.mxu0 %v399
    %v483 = vpop.f32.mrf.mxu0
    %v484 = vadd.f32 %v391, %v483
    %v485 = vpop.f32.mrf.mxu0
    %486 = vmatprep.mubr.f32.mxu0 0.0
    %487 = vmatmul.mubr.f32.gmra.mxu0 %v402
    %v488 = vpop.f32.mrf.mxu0
    %v489 = vadd.f32 %v391, %v488
    %v490 = vpop.f32.mrf.mxu0
    %491 = vmatprep.mubr.f32.mxu0 0.0
    %492 = vmatmul.mubr.f32.gmra.mxu0 %v405
    %v493 = vpop.f32.mrf.mxu0
    %v494 = vadd.f32 %v391, %v493
    %v495 = vpop.f32.mrf.mxu0
    %496 = vdwg.mxu0
    %vm497 = vcmp.lt.s32.totalorder %v107, 16
    %v498 = vsel %vm497, %v474, 0.0
    %v499 = vsel %vm497, %v479, 0.0
    %v500 = vsel %vm497, %v484, 0.0
    %v501 = vsel %vm497, %v489, 0.0
    %v502 = vsel %vm497, %v494, 0.0
    %vm503 = vcmp.ge.s32.totalorder %v107, 16
    %v504 = vsel %vm503, %v474, 0.0
    %v505 = vsel %vm503, %v479, 0.0
    %v506 = vsel %vm503, %v484, 0.0
    %v507 = vsel %vm503, %v489, 0.0
    %v508 = vsel %vm503, %v494, 0.0
    %vm514 = vcmask 1043456
    %v515 = vrot.slane %v504, 4
    %v516 = vrot.slane %v505, 4
    %v517 = vsel %vm514, %v515, %v516
    %v518 = vrot.slane %v506, 4
    %v519 = vsel %vm514, %v516, %v518
    %v520 = vrot.slane %v507, 4
    %v521 = vsel %vm514, %v518, %v520
    %v522 = vrot.slane %v508, 4
    %v523 = vsel %vm514, %v520, %v522
    %v525 = vsel %vm514, %v502, %v515
    %531 = vrot.lane.b32.xlu0 %v474, 96
    %v532 = vpop.permute.xlu0 %531
    %533 = vrot.lane.b32.xlu0 %v479, 96
    %v534 = vpop.permute.xlu0 %533
    %535 = vrot.lane.b32.xlu0 %v484, 96
    %v536 = vpop.permute.xlu0 %535
    %537 = vrot.lane.b32.xlu0 %v489, 96
    %v538 = vpop.permute.xlu0 %537
    %539 = vrot.lane.b32.xlu0 %v494, 96
    %v540 = vpop.permute.xlu0 %539
    %v542 = vsel %vm156, %v498, 0
    %v545 = vsel %vm156, %v499, 0
    %v548 = vsel %vm156, %v500, 0
    %v551 = vsel %vm156, %v501, 0
    %v554 = vsel %vm156, %v525, 0
    %v556 = vsel %vm156, %v517, 0
    %v558 = vsel %vm156, %v519, 0
    %v560 = vsel %vm156, %v521, 0
    %v562 = vsel %vm156, %v523, 0
    %v564 = vsel %vm156, %v532, 0
    %v566 = vsel %vm156, %v534, 0
    %v568 = vsel %vm156, %v536, 0
    %v570 = vsel %vm156, %v538, 0
    %v572 = vsel %vm156, %v540, 0
    %574 = vmatprep.subr.mxu0 0.0
    %575 = vmatpush1.xpose.msra.mxu0 0.0
    %576 = vmatprep.subr.mxu0 0.0
    %577 = vmatpush1.xpose.msra.mxu0 0.0
    %578 = vmatprep.subr.mxu0 0.0
    %579 = vmatpush1.xpose.msra.mxu0 0.0
    %580 = vmatprep.subr.mxu0 0.0
    %581 = vmatpush1.xpose.msra.mxu0 0.0
    %582 = vmatprep.subr.mxu0 0.0
    %583 = vmatpush1.xpose.msra.mxu0 0.0
    %584 = vmatprep.subr.mxu0 0.0
    %585 = vmatpush1.xpose.msra.mxu0 0.0
    %586 = vmatprep.subr.mxu0 0.0
    %587 = vmatpush1.xpose.msra.mxu0 0.0
    %588 = vmatprep.subr.mxu0 0.0
    %589 = vmatpush1.xpose.msra.mxu0 0.0
    %590 = vmatprep.subr.mxu0 0.0
    %591 = vmatpush1.xpose.msra.mxu0 0.0
    %592 = vmatprep.subr.mxu0 0.0
    %593 = vmatpush1.xpose.msra.mxu0 0.0
    %594 = vmatprep.subr.mxu0 0.0
    %595 = vmatpush1.xpose.msra.mxu0 0.0
    %596 = vmatprep.subr.mxu0 0.0
    %597 = vmatpush1.xpose.msra.mxu0 %v572
    %598 = vmatprep.subr.mxu0 0.0
    %599 = vmatpush1.xpose.msra.mxu0 %v570
    %600 = vmatprep.subr.mxu0 0.0
    %601 = vmatpush1.xpose.msra.mxu0 %v568
    %602 = vmatprep.subr.mxu0 0.0
    %603 = vmatpush1.xpose.msra.mxu0 %v566
    %604 = vmatprep.subr.mxu0 0.0
    %605 = vmatpush1.xpose.msra.mxu0 %v564
    %606 = vmatprep.subr.mxu0 0.0
    %607 = vmatpush2.xpose.msra.mxu0 0.0
    %608 = vmatprep.subr.mxu0 0.0
    %609 = vmatpush2.xpose.msra.mxu0 0.0
    %610 = vmatprep.subr.mxu0 0.0
    %611 = vmatpush2.xpose.msra.mxu0 0.0
    %612 = vmatprep.subr.mxu0 0.0
    %613 = vmatpush2.xpose.msra.mxu0 0.0
    %614 = vmatprep.subr.mxu0 0.0
    %615 = vmatpush2.xpose.msra.mxu0 0.0
    %616 = vmatprep.subr.mxu0 0.0
    %617 = vmatpush2.xpose.msra.mxu0 0.0
    %618 = vmatprep.subr.mxu0 0.0
    %619 = vmatpush2.xpose.msra.mxu0 0.0
    %620 = vmatprep.subr.mxu0 0.0
    %621 = vmatpush2.xpose.msra.mxu0 0.0
    %622 = vmatprep.subr.mxu0 0.0
    %623 = vmatpush2.xpose.msra.mxu0 0.0
    %624 = vmatprep.subr.mxu0 0.0
    %625 = vmatpush2.xpose.msra.mxu0 0.0
    %626 = vmatprep.subr.mxu0 0.0
    %627 = vmatpush2.xpose.msra.mxu0 0.0
    %628 = vmatprep.subr.mxu0 0.0
    %629 = vmatpush2.xpose.msra.mxu0 0.0
    %630 = vmatprep.subr.mxu0 0.0
    %631 = vmatpush2.xpose.msra.mxu0 0.0
    %632 = vmatprep.subr.mxu0 0.0
    %633 = vmatpush2.xpose.msra.mxu0 0.0
    %634 = vmatprep.subr.mxu0 0.0
    %635 = vmatpush2.xpose.msra.mxu0 0.0
    %636 = vmatprep.subr.mxu0 0.0
    %637 = vmatpush2.xpose.msra.mxu0 0.0
    %638 = vmatprep.mubr.f32.mxu0 0.0
    %639 = vmatmul.mubr.f32.gmra.mxu0 %v542
    %v640 = vpop.f32.mrf.mxu0
    %v641 = vadd.f32 %v379, %v640
    %v642 = vpop.f32.mrf.mxu0
    %643 = vmatprep.mubr.f32.mxu0 0.0
    %644 = vmatmul.mubr.f32.gmra.mxu0 %v545
    %v645 = vpop.f32.mrf.mxu0
    %v646 = vadd.f32 %v380, %v645
    %v647 = vpop.f32.mrf.mxu0
    %648 = vmatprep.mubr.f32.mxu0 0.0
    %649 = vmatmul.mubr.f32.gmra.mxu0 %v548
    %v650 = vpop.f32.mrf.mxu0
    %v651 = vadd.f32 %v381, %v650
    %v652 = vpop.f32.mrf.mxu0
    %653 = vmatprep.mubr.f32.mxu0 0.0
    %654 = vmatmul.mubr.f32.gmra.mxu0 %v551
    %v655 = vpop.f32.mrf.mxu0
    %v656 = vadd.f32 %v382, %v655
    %v657 = vpop.f32.mrf.mxu0
    %658 = vmatprep.mubr.f32.mxu0 0.0
    %659 = vmatmul.mubr.f32.gmra.mxu0 %v554
    %v660 = vpop.f32.mrf.mxu0
    %v661 = vadd.f32 %v383, %v660
    %v662 = vpop.f32.mrf.mxu0
    %663 = vmatprep.mubr.f32.mxu0 0.0
    %664 = vmatmul.mubr.f32.gmra.mxu0 %v556
    %v665 = vpop.f32.mrf.mxu0
    %v666 = vadd.f32 %v384, %v665
    %v667 = vpop.f32.mrf.mxu0
    %668 = vmatprep.mubr.f32.mxu0 0.0
    %669 = vmatmul.mubr.f32.gmra.mxu0 %v558
    %v670 = vpop.f32.mrf.mxu0
    %v671 = vadd.f32 %v385, %v670
    %v672 = vpop.f32.mrf.mxu0
    %673 = vmatprep.mubr.f32.mxu0 0.0
    %674 = vmatmul.mubr.f32.gmra.mxu0 %v560
    %v675 = vpop.f32.mrf.mxu0
    %v676 = vadd.f32 %v386, %v675
    %v677 = vpop.f32.mrf.mxu0
    %678 = vmatprep.mubr.f32.mxu0 0.0
    %679 = vmatmul.mubr.f32.gmra.mxu0 %v562
    %v680 = vpop.f32.mrf.mxu0
    %v681 = vadd.f32 %v387, %v680
    %v682 = vpop.f32.mrf.mxu0
    %683 = vdwg.mxu0
    %vm684 = vcmask 293888
    %v685 = vsel %vm684, %v641, -inf
    %686 = vmax.xlane.f32.xlu0 %v685
    %v687 = vpop.xlane.xlu0 %686
    %v688 = vsel %vm684, %v646, -inf
    %689 = vmax.xlane.f32.xlu0 %v688
    %v690 = vpop.xlane.xlu0 %689
    %v691 = vsel %vm684, %v651, -inf
    %692 = vmax.xlane.f32.xlu0 %v691
    %v693 = vpop.xlane.xlu0 %692
    %v694 = vsel %vm684, %v656, -inf
    %695 = vmax.xlane.f32.xlu0 %v694
    %v696 = vpop.xlane.xlu0 %695
    %v697 = vsel %vm684, %v661, -inf
    %698 = vmax.xlane.f32.xlu0 %v697
    %v699 = vpop.xlane.xlu0 %698
    %v700 = vsel %vm684, %v666, -inf
    %701 = vmax.xlane.f32.xlu0 %v700
    %v702 = vpop.xlane.xlu0 %701
    %v703 = vsel %vm684, %v671, -inf
    %704 = vmax.xlane.f32.xlu0 %v703
    %v705 = vpop.xlane.xlu0 %704
    %v706 = vsel %vm684, %v676, -inf
    %707 = vmax.xlane.f32.xlu0 %v706
    %v708 = vpop.xlane.xlu0 %707
    %v709 = vsel %vm684, %v681, -inf
    %710 = vmax.xlane.f32.xlu0 %v709
    %v711 = vpop.xlane.xlu0 %710
    %v712 = vsub.f32 %v641, %v687
    %v713 = vsub.f32 %v646, %v690
    %v714 = vsub.f32 %v651, %v693
    %v715 = vsub.f32 %v656, %v696
    %v716 = vsub.f32 %v661, %v699
    %v717 = vsub.f32 %v666, %v702
    %v718 = vsub.f32 %v671, %v705
    %v719 = vsub.f32 %v676, %v708
    %v720 = vsub.f32 %v681, %v711
    %v721 = vmul.f32 %v712, 1.442695
    %v722 = vpow.pop %v721
    %v723 = vmul.f32 %v713, 1.442695
    %v724 = vpow.pop %v723
    %v725 = vmul.f32 %v714, 1.442695
    %v726 = vpow.pop %v725
    %v727 = vmul.f32 %v715, 1.442695
    %v728 = vpow.pop %v727
    %v729 = vmul.f32 %v716, 1.442695
    %v730 = vpow.pop %v729
    %v731 = vmul.f32 %v717, 1.442695
    %v732 = vpow.pop %v731
    %v733 = vmul.f32 %v718, 1.442695
    %v734 = vpow.pop %v733
    %v735 = vmul.f32 %v719, 1.442695
    %v736 = vpow.pop %v735
    %v737 = vmul.f32 %v720, 1.442695
    %v738 = vpow.pop %v737
    %v739 = vsel %vm684, %v722, 0.0
    %740 = vadd.xlane.f32.xlu0 %v739
    %v741 = vpop.xlane.xlu0 %740
    %v742 = vsel %vm684, %v724, 0.0
    %743 = vadd.xlane.f32.xlu0 %v742
    %v744 = vpop.xlane.xlu0 %743
    %v745 = vsel %vm684, %v726, 0.0
    %746 = vadd.xlane.f32.xlu0 %v745
    %v747 = vpop.xlane.xlu0 %746
    %v748 = vsel %vm684, %v728, 0.0
    %749 = vadd.xlane.f32.xlu0 %v748
    %v750 = vpop.xlane.xlu0 %749
    %v751 = vsel %vm684, %v730, 0.0
    %752 = vadd.xlane.f32.xlu0 %v751
    %v753 = vpop.xlane.xlu0 %752
    %v754 = vsel %vm684, %v732, 0.0
    %755 = vadd.xlane.f32.xlu0 %v754
    %v756 = vpop.xlane.xlu0 %755
    %v757 = vsel %vm684, %v734, 0.0
    %758 = vadd.xlane.f32.xlu0 %v757
    %v759 = vpop.xlane.xlu0 %758
    %v760 = vsel %vm684, %v736, 0.0
    %761 = vadd.xlane.f32.xlu0 %v760
    %v762 = vpop.xlane.xlu0 %761
    %v763 = vsel %vm684, %v738, 0.0
    %764 = vadd.xlane.f32.xlu0 %v763
    %v765 = vpop.xlane.xlu0 %764
    %v766 = vrcp.pop %v741
    %v767 = vmul.f32 %v722, %v766
    %v768 = vrcp.pop %v744
    %v769 = vmul.f32 %v724, %v768
    %v770 = vrcp.pop %v747
    %v771 = vmul.f32 %v726, %v770
    %v772 = vrcp.pop %v750
    %v773 = vmul.f32 %v728, %v772
    %v774 = vrcp.pop %v753
    %v775 = vmul.f32 %v730, %v774
    %v776 = vrcp.pop %v756
    %v777 = vmul.f32 %v732, %v776
    %v778 = vrcp.pop %v759
    %v779 = vmul.f32 %v734, %v778
    %v780 = vrcp.pop %v762
    %v781 = vmul.f32 %v736, %v780
    %v782 = vrcp.pop %v765
    %v783 = vmul.f32 %v738, %v782
    %784 = vrot.lane.b32.xlu0 %v474, 64
    %v785 = vpop.permute.xlu0 %784
    %786 = vrot.lane.b32.xlu0 %v479, 64
    %v787 = vpop.permute.xlu0 %786
    %788 = vrot.lane.b32.xlu0 %v484, 64
    %v789 = vpop.permute.xlu0 %788
    %790 = vrot.lane.b32.xlu0 %v489, 64
    %v791 = vpop.permute.xlu0 %790
    %792 = vrot.lane.b32.xlu0 %v494, 64
    %v793 = vpop.permute.xlu0 %792
    %v799 = vsel %vm684, %v767, 0
    %v802 = vsel %vm684, %v769, 0
    %v805 = vsel %vm684, %v771, 0
    %v808 = vsel %vm684, %v773, 0
    %v811 = vsel %vm684, %v775, 0
    %v814 = vsel %vm684, %v777, 0
    %v817 = vsel %vm684, %v779, 0
    %v820 = vsel %vm684, %v781, 0
    %v823 = vsel %vm684, %v783, 0
    %v825 = vsel %vm514, %v793, 0
    %827 = vmatprep.subr.mxu0 0.0
    %828 = vmatpush1.msra.mxu0 0.0
    %829 = vmatprep.subr.mxu0 0.0
    %830 = vmatpush1.msra.mxu0 0.0
    %831 = vmatprep.subr.mxu0 0.0
    %832 = vmatpush1.msra.mxu0 0.0
    %833 = vmatprep.subr.mxu0 0.0
    %834 = vmatpush1.msra.mxu0 0.0
    %835 = vmatprep.subr.mxu0 0.0
    %836 = vmatpush1.msra.mxu0 0.0
    %837 = vmatprep.subr.mxu0 0.0
    %838 = vmatpush1.msra.mxu0 0.0
    %839 = vmatprep.subr.mxu0 0.0
    %840 = vmatpush1.msra.mxu0 0.0
    %841 = vmatprep.subr.mxu0 0.0
    %842 = vmatpush1.msra.mxu0 0.0
    %843 = vmatprep.subr.mxu0 0.0
    %844 = vmatpush1.msra.mxu0 0.0
    %845 = vmatprep.subr.mxu0 0.0
    %846 = vmatpush1.msra.mxu0 0.0
    %847 = vmatprep.subr.mxu0 0.0
    %848 = vmatpush1.msra.mxu0 0.0
    %849 = vmatprep.subr.mxu0 0.0
    %850 = vmatpush1.msra.mxu0 %v825
    %851 = vmatprep.subr.mxu0 0.0
    %852 = vmatpush1.msra.mxu0 %v791
    %853 = vmatprep.subr.mxu0 0.0
    %854 = vmatpush1.msra.mxu0 %v789
    %855 = vmatprep.subr.mxu0 0.0
    %856 = vmatpush1.msra.mxu0 %v787
    %857 = vmatprep.subr.mxu0 0.0
    %858 = vmatpush1.msra.mxu0 %v785
    %859 = vmatprep.subr.mxu0 0.0
    %860 = vmatpush2.msra.mxu0 0.0
    %861 = vmatprep.subr.mxu0 0.0
    %862 = vmatpush2.msra.mxu0 0.0
    %863 = vmatprep.subr.mxu0 0.0
    %864 = vmatpush2.msra.mxu0 0.0
    %865 = vmatprep.subr.mxu0 0.0
    %866 = vmatpush2.msra.mxu0 0.0
    %867 = vmatprep.subr.mxu0 0.0
    %868 = vmatpush2.msra.mxu0 0.0
    %869 = vmatprep.subr.mxu0 0.0
    %870 = vmatpush2.msra.mxu0 0.0
    %871 = vmatprep.subr.mxu0 0.0
    %872 = vmatpush2.msra.mxu0 0.0
    %873 = vmatprep.subr.mxu0 0.0
    %874 = vmatpush2.msra.mxu0 0.0
    %875 = vmatprep.subr.mxu0 0.0
    %876 = vmatpush2.msra.mxu0 0.0
    %877 = vmatprep.subr.mxu0 0.0
    %878 = vmatpush2.msra.mxu0 0.0
    %879 = vmatprep.subr.mxu0 0.0
    %880 = vmatpush2.msra.mxu0 0.0
    %881 = vmatprep.subr.mxu0 0.0
    %882 = vmatpush2.msra.mxu0 0.0
    %883 = vmatprep.subr.mxu0 0.0
    %884 = vmatpush2.msra.mxu0 0.0
    %885 = vmatprep.subr.mxu0 0.0
    %886 = vmatpush2.msra.mxu0 0.0
    %887 = vmatprep.subr.mxu0 0.0
    %888 = vmatpush2.msra.mxu0 0.0
    %889 = vmatprep.subr.mxu0 0.0
    %890 = vmatpush2.msra.mxu0 0.0
    %891 = vmatprep.mubr.f32.mxu0 0.0
    %892 = vmatmul.mubr.f32.gmra.mxu0 %v799
    %v893 = vpop.f32.mrf.mxu0
    %v894 = vadd.f32 0.0, %v893
    %v895 = vpop.f32.mrf.mxu0
    %896 = vmatprep.mubr.f32.mxu0 0.0
    %897 = vmatmul.mubr.f32.gmra.mxu0 %v802
    %v898 = vpop.f32.mrf.mxu0
    %v899 = vadd.f32 0.0, %v898
    %v900 = vpop.f32.mrf.mxu0
    %901 = vmatprep.mubr.f32.mxu0 0.0
    %902 = vmatmul.mubr.f32.gmra.mxu0 %v805
    %v903 = vpop.f32.mrf.mxu0
    %v904 = vadd.f32 0.0, %v903
    %v905 = vpop.f32.mrf.mxu0
    %906 = vmatprep.mubr.f32.mxu0 0.0
    %907 = vmatmul.mubr.f32.gmra.mxu0 %v808
    %v908 = vpop.f32.mrf.mxu0
    %v909 = vadd.f32 0.0, %v908
    %v910 = vpop.f32.mrf.mxu0
    %911 = vmatprep.mubr.f32.mxu0 0.0
    %912 = vmatmul.mubr.f32.gmra.mxu0 %v811
    %v913 = vpop.f32.mrf.mxu0
    %v914 = vadd.f32 0.0, %v913
    %v915 = vpop.f32.mrf.mxu0
    %916 = vmatprep.mubr.f32.mxu0 0.0
    %917 = vmatmul.mubr.f32.gmra.mxu0 %v814
    %v918 = vpop.f32.mrf.mxu0
    %v919 = vadd.f32 0.0, %v918
    %v920 = vpop.f32.mrf.mxu0
    %921 = vmatprep.mubr.f32.mxu0 0.0
    %922 = vmatmul.mubr.f32.gmra.mxu0 %v817
    %v923 = vpop.f32.mrf.mxu0
    %v924 = vadd.f32 0.0, %v923
    %v925 = vpop.f32.mrf.mxu0
    %926 = vmatprep.mubr.f32.mxu0 0.0
    %927 = vmatmul.mubr.f32.gmra.mxu0 %v820
    %v928 = vpop.f32.mrf.mxu0
    %v929 = vadd.f32 0.0, %v928
    %v930 = vpop.f32.mrf.mxu0
    %931 = vmatprep.mubr.f32.mxu0 0.0
    %932 = vmatmul.mubr.f32.gmra.mxu0 %v823
    %v933 = vpop.f32.mrf.mxu0
    %v934 = vadd.f32 0.0, %v933
    %v935 = vpop.f32.mrf.mxu0
    %936 = vdwg.mxu0
    %v942 = vrot.slane %v914, 4
    %v943 = vrot.slane %v919, 4
    %v944 = vsel %vm514, %v942, %v943
    %v945 = vrot.slane %v924, 4
    %v946 = vsel %vm514, %v943, %v945
    %v947 = vrot.slane %v929, 4
    %v948 = vsel %vm514, %v945, %v947
    %v949 = vrot.slane %v934, 4
    %v950 = vsel %vm514, %v947, %v949
    %v956 = vsel %vm497, %v894, %v944
    %v957 = vsel %vm497, %v899, %v946
    %v958 = vsel %vm497, %v904, %v948
    %v959 = vsel %vm497, %v909, %v950
    %v960 = vsel %vm497, %v914, %v949
    %v961 = vlaneseq
    %v962 = vshrl.u32 %v961, 7
    %v963 = vsub.s32 0, %v962
    %v964 = vrot.slane %v100, %v963
    %969 = vrot.lane.b32.xlu0 %v90, 32
    %v970 = vpop.permute.xlu0 %969
    %971 = vrot.lane.b32.xlu0 %v91, 32
    %v972 = vpop.permute.xlu0 %971
    %973 = vrot.lane.b32.xlu0 %v92, 32
    %v974 = vpop.permute.xlu0 %973
    %975 = vrot.lane.b32.xlu0 %v93, 32
    %v976 = vpop.permute.xlu0 %975
    %v982 = vsel %vm156, %v956, 0
    %v985 = vsel %vm156, %v957, 0
    %v988 = vsel %vm156, %v958, 0
    %v991 = vsel %vm156, %v959, 0
    %v994 = vsel %vm156, %v960, 0
    %996 = vmatprep.subr.mxu0 0.0
    %997 = vmatpush1.msra.mxu0 0.0
    %998 = vmatprep.subr.mxu0 0.0
    %999 = vmatpush1.msra.mxu0 0.0
    %1000 = vmatprep.subr.mxu0 0.0
    %1001 = vmatpush1.msra.mxu0 0.0
    %1002 = vmatprep.subr.mxu0 0.0
    %1003 = vmatpush1.msra.mxu0 0.0
    %1004 = vmatprep.subr.mxu0 0.0
    %1005 = vmatpush1.msra.mxu0 0.0
    %1006 = vmatprep.subr.mxu0 0.0
    %1007 = vmatpush1.msra.mxu0 0.0
    %1008 = vmatprep.subr.mxu0 0.0
    %1009 = vmatpush1.msra.mxu0 0.0
    %1010 = vmatprep.subr.mxu0 0.0
    %1011 = vmatpush1.msra.mxu0 0.0
    %1012 = vmatprep.subr.mxu0 0.0
    %1013 = vmatpush1.msra.mxu0 0.0
    %1014 = vmatprep.subr.mxu0 0.0
    %1015 = vmatpush1.msra.mxu0 0.0
    %1016 = vmatprep.subr.mxu0 0.0
    %1017 = vmatpush1.msra.mxu0 0.0
    %1018 = vmatprep.subr.mxu0 0.0
    %1019 = vmatpush1.msra.mxu0 0.0
    %1020 = vmatprep.subr.mxu0 0.0
    %1021 = vmatpush1.msra.mxu0 %v976
    %1022 = vmatprep.subr.mxu0 0.0
    %1023 = vmatpush1.msra.mxu0 %v974
    %1024 = vmatprep.subr.mxu0 0.0
    %1025 = vmatpush1.msra.mxu0 %v972
    %1026 = vmatprep.subr.mxu0 0.0
    %1027 = vmatpush1.msra.mxu0 %v970
    %1028 = vmatprep.subr.mxu0 0.0
    %1029 = vmatpush2.msra.mxu0 0.0
    %1030 = vmatprep.subr.mxu0 0.0
    %1031 = vmatpush2.msra.mxu0 0.0
    %1032 = vmatprep.subr.mxu0 0.0
    %1033 = vmatpush2.msra.mxu0 0.0
    %1034 = vmatprep.subr.mxu0 0.0
    %1035 = vmatpush2.msra.mxu0 0.0
    %1036 = vmatprep.subr.mxu0 0.0
    %1037 = vmatpush2.msra.mxu0 0.0
    %1038 = vmatprep.subr.mxu0 0.0
    %1039 = vmatpush2.msra.mxu0 0.0
    %1040 = vmatprep.subr.mxu0 0.0
    %1041 = vmatpush2.msra.mxu0 0.0
    %1042 = vmatprep.subr.mxu0 0.0
    %1043 = vmatpush2.msra.mxu0 0.0
    %1044 = vmatprep.subr.mxu0 0.0
    %1045 = vmatpush2.msra.mxu0 0.0
    %1046 = vmatprep.subr.mxu0 0.0
    %1047 = vmatpush2.msra.mxu0 0.0
    %1048 = vmatprep.subr.mxu0 0.0
    %1049 = vmatpush2.msra.mxu0 0.0
    %1050 = vmatprep.subr.mxu0 0.0
    %1051 = vmatpush2.msra.mxu0 0.0
    %1052 = vmatprep.subr.mxu0 0.0
    %1053 = vmatpush2.msra.mxu0 0.0
    %1054 = vmatprep.subr.mxu0 0.0
    %1055 = vmatpush2.msra.mxu0 0.0
    %1056 = vmatprep.subr.mxu0 0.0
    %1057 = vmatpush2.msra.mxu0 0.0
    %1058 = vmatprep.subr.mxu0 0.0
    %1059 = vmatpush2.msra.mxu0 0.0
    %1060 = vmatprep.mubr.f32.mxu0 0.0
    %1061 = vmatmul.mubr.f32.gmra.mxu0 %v982
    %v1062 = vpop.f32.mrf.mxu0
    %v1063 = vadd.f32 %v964, %v1062
    %v1064 = vpop.f32.mrf.mxu0
    %1065 = vmatprep.mubr.f32.mxu0 0.0
    %1066 = vmatmul.mubr.f32.gmra.mxu0 %v985
    %v1067 = vpop.f32.mrf.mxu0
    %v1068 = vadd.f32 %v964, %v1067
    %v1069 = vpop.f32.mrf.mxu0
    %1070 = vmatprep.mubr.f32.mxu0 0.0
    %1071 = vmatmul.mubr.f32.gmra.mxu0 %v988
    %v1072 = vpop.f32.mrf.mxu0
    %v1073 = vadd.f32 %v964, %v1072
    %v1074 = vpop.f32.mrf.mxu0
    %1075 = vmatprep.mubr.f32.mxu0 0.0
    %1076 = vmatmul.mubr.f32.gmra.mxu0 %v991
    %v1077 = vpop.f32.mrf.mxu0
    %v1078 = vadd.f32 %v964, %v1077
    %v1079 = vpop.f32.mrf.mxu0
    %1080 = vmatprep.mubr.f32.mxu0 0.0
    %1081 = vmatmul.mubr.f32.gmra.mxu0 %v994
    %v1082 = vpop.f32.mrf.mxu0
    %v1083 = vadd.f32 %v964, %v1082
    %v1084 = vpop.f32.mrf.mxu0
    %1085 = vdwg.mxu0
    %v1086 = vadd.f32 %v234, %v1063
    %v1087 = vadd.f32 %v239, %v1068
    %v1088 = vadd.f32 %v244, %v1073
    %v1089 = vadd.f32 %v249, %v1078
    %v1090 = vadd.f32 %v254, %v1083
    %v1091 = vsel %vm156, %v1086, 0.0
    %1092 = vadd.xlane.f32.xlu0 %v1091
    %v1093 = vpop.xlane.xlu0 %1092
    %v1094 = vsel %vm156, %v1087, 0.0
    %1095 = vadd.xlane.f32.xlu0 %v1094
    %v1096 = vpop.xlane.xlu0 %1095
    %v1097 = vsel %vm156, %v1088, 0.0
    %1098 = vadd.xlane.f32.xlu0 %v1097
    %v1099 = vpop.xlane.xlu0 %1098
    %v1100 = vsel %vm156, %v1089, 0.0
    %1101 = vadd.xlane.f32.xlu0 %v1100
    %v1102 = vpop.xlane.xlu0 %1101
    %vm1103 = vcmask 257024
    %v1104 = vsel %vm1103, %v1090, 0.0
    %1105 = vadd.xlane.f32.xlu0 %v1104
    %v1106 = vpop.xlane.xlu0 %1105
    %v1107 = vrcp.pop 32.0
    %v1108 = vmul.f32 %v1093, %v1107
    %v1109 = vmul.f32 %v1096, %v1107
    %v1110 = vmul.f32 %v1099, %v1107
    %v1111 = vmul.f32 %v1102, %v1107
    %v1112 = vmul.f32 %v1106, %v1107
    %v1113 = vsub.f32 %v1086, %v1108
    %v1114 = vsub.f32 %v1087, %v1109
    %v1115 = vsub.f32 %v1088, %v1110
    %v1116 = vsub.f32 %v1089, %v1111
    %v1117 = vsub.f32 %v1090, %v1112
    %v1118 = vmul.f32 %v1113, %v1113
    %v1119 = vmul.f32 %v1114, %v1114
    %v1120 = vmul.f32 %v1115, %v1115
    %v1121 = vmul.f32 %v1116, %v1116
    %v1122 = vmul.f32 %v1117, %v1117
    %v1123 = vsel %vm156, %v1118, 0.0
    %1124 = vadd.xlane.f32.xlu0 %v1123
    %v1125 = vpop.xlane.xlu0 %1124
    %v1126 = vsel %vm156, %v1119, 0.0
    %1127 = vadd.xlane.f32.xlu0 %v1126
    %v1128 = vpop.xlane.xlu0 %1127
    %v1129 = vsel %vm156, %v1120, 0.0
    %1130 = vadd.xlane.f32.xlu0 %v1129
    %v1131 = vpop.xlane.xlu0 %1130
    %v1132 = vsel %vm156, %v1121, 0.0
    %1133 = vadd.xlane.f32.xlu0 %v1132
    %v1134 = vpop.xlane.xlu0 %1133
    %v1135 = vsel %vm1103, %v1122, 0.0
    %1136 = vadd.xlane.f32.xlu0 %v1135
    %v1137 = vpop.xlane.xlu0 %1136
    %v1138 = vmul.f32 %v1125, %v1107
    %v1139 = vmul.f32 %v1128, %v1107
    %v1140 = vmul.f32 %v1131, %v1107
    %v1141 = vmul.f32 %v1134, %v1107
    %v1142 = vmul.f32 %v1137, %v1107
    %v1143 = vadd.f32 %v1138, 1e-12
    %v1144 = vadd.f32 %v1139, 1e-12
    %v1145 = vadd.f32 %v1140, 1e-12
    %v1146 = vadd.f32 %v1141, 1e-12
    %v1147 = vadd.f32 %v1142, 1e-12
    %v1148 = vrsqrt.pop %v1143
    %v1149 = vrsqrt.pop %v1144
    %v1150 = vrsqrt.pop %v1145
    %v1151 = vrsqrt.pop %v1146
    %v1152 = vrsqrt.pop %v1147
    %v1153 = vmul.f32 %v1113, %v1148
    %v1154 = vmul.f32 %v1114, %v1149
    %v1155 = vmul.f32 %v1115, %v1150
    %v1156 = vmul.f32 %v1116, %v1151
    %v1157 = vmul.f32 %v1117, %v1152
    %v1158 = vlaneseq
    %v1159 = vshrl.u32 %v1158, 7
    %v1160 = vsub.s32 0, %v1159
    %v1161 = vrot.slane %v101, %v1160
    %v1162 = vmul.f32 %v1153, %v1161
    %v1163 = vmul.f32 %v1154, %v1161
    %v1164 = vmul.f32 %v1155, %v1161
    %v1165 = vmul.f32 %v1156, %v1161
    %v1166 = vmul.f32 %v1157, %v1161
    %v1167 = vlaneseq
    %v1168 = vshrl.u32 %v1167, 7
    %v1169 = vsub.s32 0, %v1168
    %v1170 = vrot.slane %v102, %v1169
    %v1171 = vadd.f32 %v1162, %v1170
    %v1172 = vadd.f32 %v1163, %v1170
    %v1173 = vadd.f32 %v1164, %v1170
    %v1174 = vadd.f32 %v1165, %v1170
    %v1175 = vadd.f32 %v1166, %v1170
    %v1176 = vlaneseq
    %v1177 = vshrl.u32 %v1176, 7
    %v1178 = vsub.s32 0, %v1177
    %v1179 = vrot.slane %v99, %v1178
    %v1181 = vsel %vm156, %v1171, 0
    %v1184 = vsel %vm156, %v1172, 0
    %v1187 = vsel %vm156, %v1173, 0
    %v1190 = vsel %vm156, %v1174, 0
    %v1193 = vsel %vm156, %v1175, 0
    %1195 = vmatprep.subr.mxu0 0.0
    %1196 = vmatpush1.msra.mxu0 0.0
    %1197 = vmatprep.subr.mxu0 0.0
    %1198 = vmatpush1.msra.mxu0 0.0
    %1199 = vmatprep.subr.mxu0 0.0
    %1200 = vmatpush1.msra.mxu0 0.0
    %1201 = vmatprep.subr.mxu0 0.0
    %1202 = vmatpush1.msra.mxu0 0.0
    %1203 = vmatprep.subr.mxu0 0.0
    %1204 = vmatpush1.msra.mxu0 0.0
    %1205 = vmatprep.subr.mxu0 0.0
    %1206 = vmatpush1.msra.mxu0 0.0
    %1207 = vmatprep.subr.mxu0 0.0
    %1208 = vmatpush1.msra.mxu0 0.0
    %1209 = vmatprep.subr.mxu0 0.0
    %1210 = vmatpush1.msra.mxu0 0.0
    %1211 = vmatprep.subr.mxu0 0.0
    %1212 = vmatpush1.msra.mxu0 0.0
    %1213 = vmatprep.subr.mxu0 0.0
    %1214 = vmatpush1.msra.mxu0 0.0
    %1215 = vmatprep.subr.mxu0 0.0
    %1216 = vmatpush1.msra.mxu0 0.0
    %1217 = vmatprep.subr.mxu0 0.0
    %1218 = vmatpush1.msra.mxu0 0.0
    %1219 = vmatprep.subr.mxu0 0.0
    %1220 = vmatpush1.msra.mxu0 %v97
    %1221 = vmatprep.subr.mxu0 0.0
    %1222 = vmatpush1.msra.mxu0 %v96
    %1223 = vmatprep.subr.mxu0 0.0
    %1224 = vmatpush1.msra.mxu0 %v95
    %1225 = vmatprep.subr.mxu0 0.0
    %1226 = vmatpush1.msra.mxu0 %v94
    %1227 = vmatprep.subr.mxu0 0.0
    %1228 = vmatpush2.msra.mxu0 0.0
    %1229 = vmatprep.subr.mxu0 0.0
    %1230 = vmatpush2.msra.mxu0 0.0
    %1231 = vmatprep.subr.mxu0 0.0
    %1232 = vmatpush2.msra.mxu0 0.0
    %1233 = vmatprep.subr.mxu0 0.0
    %1234 = vmatpush2.msra.mxu0 0.0
    %1235 = vmatprep.subr.mxu0 0.0
    %1236 = vmatpush2.msra.mxu0 0.0
    %1237 = vmatprep.subr.mxu0 0.0
    %1238 = vmatpush2.msra.mxu0 0.0
    %1239 = vmatprep.subr.mxu0 0.0
    %1240 = vmatpush2.msra.mxu0 0.0
    %1241 = vmatprep.subr.mxu0 0.0
    %1242 = vmatpush2.msra.mxu0 0.0
    %1243 = vmatprep.subr.mxu0 0.0
    %1244 = vmatpush2.msra.mxu0 0.0
    %1245 = vmatprep.subr.mxu0 0.0
    %1246 = vmatpush2.msra.mxu0 0.0
    %1247 = vmatprep.subr.mxu0 0.0
    %1248 = vmatpush2.msra.mxu0 0.0
    %1249 = vmatprep.subr.mxu0 0.0
    %1250 = vmatpush2.msra.mxu0 0.0
    %1251 = vmatprep.subr.mxu0 0.0
    %1252 = vmatpush2.msra.mxu0 0.0
    %1253 = vmatprep.subr.mxu0 0.0
    %1254 = vmatpush2.msra.mxu0 0.0
    %1255 = vmatprep.subr.mxu0 0.0
    %1256 = vmatpush2.msra.mxu0 0.0
    %1257 = vmatprep.subr.mxu0 0.0
    %1258 = vmatpush2.msra.mxu0 0.0
    %1259 = vmatprep.mubr.f32.mxu0 0.0
    %1260 = vmatmul.mubr.f32.gmra.mxu0 %v1181
    %v1261 = vpop.f32.mrf.mxu0
    %v1262 = vadd.f32 %v1179, %v1261
    %v1263 = vpop.f32.mrf.mxu0
    %1264 = vmatprep.mubr.f32.mxu0 0.0
    %1265 = vmatmul.mubr.f32.gmra.mxu0 %v1184
    %v1266 = vpop.f32.mrf.mxu0
    %v1267 = vadd.f32 %v1179, %v1266
    %v1268 = vpop.f32.mrf.mxu0
    %1269 = vmatprep.mubr.f32.mxu0 0.0
    %1270 = vmatmul.mubr.f32.gmra.mxu0 %v1187
    %v1271 = vpop.f32.mrf.mxu0
    %v1272 = vadd.f32 %v1179, %v1271
    %v1273 = vpop.f32.mrf.mxu0
    %1274 = vmatprep.mubr.f32.mxu0 0.0
    %1275 = vmatmul.mubr.f32.gmra.mxu0 %v1190
    %v1276 = vpop.f32.mrf.mxu0
    %v1277 = vadd.f32 %v1179, %v1276
    %v1278 = vpop.f32.mrf.mxu0
    %1279 = vmatprep.mubr.f32.mxu0 0.0
    %1280 = vmatmul.mubr.f32.gmra.mxu0 %v1193
    %v1281 = vpop.f32.mrf.mxu0
    %v1282 = vadd.f32 %v1179, %v1281
    %v1283 = vpop.f32.mrf.mxu0
    %1284 = vdwg.mxu0
    %v1285 = vmul.f32 %v1262, 0.5
    %v1286 = vmul.f32 %v1267, 0.5
    %v1287 = vmul.f32 %v1272, 0.5
    %v1288 = vmul.f32 %v1277, 0.5
    %v1289 = vmul.f32 %v1282, 0.5
    %v1290 = vmul.f32 %v1262, 0.044715
    %v1291 = vmul.f32 %v1267, 0.044715
    %v1292 = vmul.f32 %v1272, 0.044715
    %v1293 = vmul.f32 %v1277, 0.044715
    %v1294 = vmul.f32 %v1282, 0.044715
    %v1295 = vmul.f32 %v1290, %v1262
    %v1296 = vmul.f32 %v1291, %v1267
    %v1297 = vmul.f32 %v1292, %v1272
    %v1298 = vmul.f32 %v1293, %v1277
    %v1299 = vmul.f32 %v1294, %v1282
    %v1300 = vmul.f32 %v1295, %v1262
    %v1301 = vmul.f32 %v1296, %v1267
    %v1302 = vmul.f32 %v1297, %v1272
    %v1303 = vmul.f32 %v1298, %v1277
    %v1304 = vmul.f32 %v1299, %v1282
    %v1305 = vadd.f32 %v1262, %v1300
    %v1306 = vadd.f32 %v1267, %v1301
    %v1307 = vadd.f32 %v1272, %v1302
    %v1308 = vadd.f32 %v1277, %v1303
    %v1309 = vadd.f32 %v1282, %v1304
    %v1310 = vmul.f32 %v1305, 0.7978846
    %v1311 = vmul.f32 %v1306, 0.7978846
    %v1312 = vmul.f32 %v1307, 0.7978846
    %v1313 = vmul.f32 %v1308, 0.7978846
    %v1314 = vmul.f32 %v1309, 0.7978846
    %v1315 = vtanh.pop %v1310
    %v1316 = vtanh.pop %v1311
    %v1317 = vtanh.pop %v1312
    %v1318 = vtanh.pop %v1313
    %v1319 = vtanh.pop %v1314
    %v1320 = vadd.f32 %v1315, 1.0
    %v1321 = vadd.f32 %v1316, 1.0
    %v1322 = vadd.f32 %v1317, 1.0
    %v1323 = vadd.f32 %v1318, 1.0
    %v1324 = vadd.f32 %v1319, 1.0
    %v1325 = vmul.f32 %v1285, %v1320
    %v1326 = vmul.f32 %v1286, %v1321
    %v1327 = vmul.f32 %v1287, %v1322
    %v1328 = vmul.f32 %v1288, %v1323
    %v1329 = vmul.f32 %v1289, %v1324
    %v1330 = vlaneseq
    %v1331 = vshrl.u32 %v1330, 7
    %v1332 = vsub.s32 0, %v1331
    %v1333 = vrot.slane %v103, %v1332
    %1338 = vrot.lane.b32.xlu0 %v94, 64
    %v1339 = vpop.permute.xlu0 %1338
    %1340 = vrot.lane.b32.xlu0 %v95, 64
    %v1341 = vpop.permute.xlu0 %1340
    %1342 = vrot.lane.b32.xlu0 %v96, 64
    %v1343 = vpop.permute.xlu0 %1342
    %1344 = vrot.lane.b32.xlu0 %v97, 64
    %v1345 = vpop.permute.xlu0 %1344
    %vm1346 = vcmask 523264
    %v1348 = vsel %vm1346, %v1325, 0
    %v1351 = vsel %vm1346, %v1326, 0
    %v1354 = vsel %vm1346, %v1327, 0
    %v1357 = vsel %vm1346, %v1328, 0
    %v1360 = vsel %vm1346, %v1329, 0
    %v1362 = vsel %vm1346, %v1339, 0
    %v1364 = vsel %vm1346, %v1341, 0
    %v1366 = vsel %vm1346, %v1343, 0
    %v1368 = vsel %vm1346, %v1345, 0
    %1370 = vmatprep.subr.mxu0 0.0
    %1371 = vmatpush1.xpose.msra.mxu0 0.0
    %1372 = vmatprep.subr.mxu0 0.0
    %1373 = vmatpush1.xpose.msra.mxu0 0.0
    %1374 = vmatprep.subr.mxu0 0.0
    %1375 = vmatpush1.xpose.msra.mxu0 0.0
    %1376 = vmatprep.subr.mxu0 0.0
    %1377 = vmatpush1.xpose.msra.mxu0 0.0
    %1378 = vmatprep.subr.mxu0 0.0
    %1379 = vmatpush1.xpose.msra.mxu0 0.0
    %1380 = vmatprep.subr.mxu0 0.0
    %1381 = vmatpush1.xpose.msra.mxu0 0.0
    %1382 = vmatprep.subr.mxu0 0.0
    %1383 = vmatpush1.xpose.msra.mxu0 0.0
    %1384 = vmatprep.subr.mxu0 0.0
    %1385 = vmatpush1.xpose.msra.mxu0 0.0
    %1386 = vmatprep.subr.mxu0 0.0
    %1387 = vmatpush1.xpose.msra.mxu0 0.0
    %1388 = vmatprep.subr.mxu0 0.0
    %1389 = vmatpush1.xpose.msra.mxu0 0.0
    %1390 = vmatprep.subr.mxu0 0.0
    %1391 = vmatpush1.xpose.msra.mxu0 0.0
    %1392 = vmatprep.subr.mxu0 0.0
    %1393 = vmatpush1.xpose.msra.mxu0 0.0
    %1394 = vmatprep.subr.mxu0 0.0
    %1395 = vmatpush1.xpose.msra.mxu0 %v1368
    %1396 = vmatprep.subr.mxu0 0.0
    %1397 = vmatpush1.xpose.msra.mxu0 %v1366
    %1398 = vmatprep.subr.mxu0 0.0
    %1399 = vmatpush1.xpose.msra.mxu0 %v1364
    %1400 = vmatprep.subr.mxu0 0.0
    %1401 = vmatpush1.xpose.msra.mxu0 %v1362
    %1402 = vmatprep.subr.mxu0 0.0
    %1403 = vmatpush2.xpose.msra.mxu0 0.0
    %1404 = vmatprep.subr.mxu0 0.0
    %1405 = vmatpush2.xpose.msra.mxu0 0.0
    %1406 = vmatprep.subr.mxu0 0.0
    %1407 = vmatpush2.xpose.msra.mxu0 0.0
    %1408 = vmatprep.subr.mxu0 0.0
    %1409 = vmatpush2.xpose.msra.mxu0 0.0
    %1410 = vmatprep.subr.mxu0 0.0
    %1411 = vmatpush2.xpose.msra.mxu0 0.0
    %1412 = vmatprep.subr.mxu0 0.0
    %1413 = vmatpush2.xpose.msra.mxu0 0.0
    %1414 = vmatprep.subr.mxu0 0.0
    %1415 = vmatpush2.xpose.msra.mxu0 0.0
    %1416 = vmatprep.subr.mxu0 0.0
    %1417 = vmatpush2.xpose.msra.mxu0 0.0
    %1418 = vmatprep.subr.mxu0 0.0
    %1419 = vmatpush2.xpose.msra.mxu0 0.0
    %1420 = vmatprep.subr.mxu0 0.0
    %1421 = vmatpush2.xpose.msra.mxu0 0.0
    %1422 = vmatprep.subr.mxu0 0.0
    %1423 = vmatpush2.xpose.msra.mxu0 0.0
    %1424 = vmatprep.subr.mxu0 0.0
    %1425 = vmatpush2.xpose.msra.mxu0 0.0
    %1426 = vmatprep.subr.mxu0 0.0
    %1427 = vmatpush2.xpose.msra.mxu0 0.0
    %1428 = vmatprep.subr.mxu0 0.0
    %1429 = vmatpush2.xpose.msra.mxu0 0.0
    %1430 = vmatprep.subr.mxu0 0.0
    %1431 = vmatpush2.xpose.msra.mxu0 0.0
    %1432 = vmatprep.subr.mxu0 0.0
    %1433 = vmatpush2.xpose.msra.mxu0 0.0
    %1434 = vmatprep.mubr.f32.mxu0 0.0
    %1435 = vmatmul.mubr.f32.gmra.mxu0 %v1348
    %v1436 = vpop.f32.mrf.mxu0
    %v1437 = vadd.f32 %v1333, %v1436
    %v1438 = vpop.f32.mrf.mxu0
    %1439 = vmatprep.mubr.f32.mxu0 0.0
    %1440 = vmatmul.mubr.f32.gmra.mxu0 %v1351
    %v1441 = vpop.f32.mrf.mxu0
    %v1442 = vadd.f32 %v1333, %v1441
    %v1443 = vpop.f32.mrf.mxu0
    %1444 = vmatprep.mubr.f32.mxu0 0.0
    %1445 = vmatmul.mubr.f32.gmra.mxu0 %v1354
    %v1446 = vpop.f32.mrf.mxu0
    %v1447 = vadd.f32 %v1333, %v1446
    %v1448 = vpop.f32.mrf.mxu0
    %1449 = vmatprep.mubr.f32.mxu0 0.0
    %1450 = vmatmul.mubr.f32.gmra.mxu0 %v1357
    %v1451 = vpop.f32.mrf.mxu0
    %v1452 = vadd.f32 %v1333, %v1451
    %v1453 = vpop.f32.mrf.mxu0
    %1454 = vmatprep.mubr.f32.mxu0 0.0
    %1455 = vmatmul.mubr.f32.gmra.mxu0 %v1360
    %v1456 = vpop.f32.mrf.mxu0
    %v1457 = vadd.f32 %v1333, %v1456
    %v1458 = vpop.f32.mrf.mxu0
    %1459 = vdwg.mxu0
    %v1460 = vadd.f32 %v1171, %v1437
    %v1461 = vadd.f32 %v1172, %v1442
    %v1462 = vadd.f32 %v1173, %v1447
    %v1463 = vadd.f32 %v1174, %v1452
    %v1464 = vadd.f32 %v1175, %v1457
    %v1465 = vsel %vm156, %v1460, 0.0
    %1466 = vadd.xlane.f32.xlu0 %v1465
    %v1467 = vpop.xlane.xlu0 %1466
    %v1468 = vsel %vm156, %v1461, 0.0
    %1469 = vadd.xlane.f32.xlu0 %v1468
    %v1470 = vpop.xlane.xlu0 %1469
    %v1471 = vsel %vm156, %v1462, 0.0
    %1472 = vadd.xlane.f32.xlu0 %v1471
    %v1473 = vpop.xlane.xlu0 %1472
    %v1474 = vsel %vm156, %v1463, 0.0
    %1475 = vadd.xlane.f32.xlu0 %v1474
    %v1476 = vpop.xlane.xlu0 %1475
    %v1477 = vsel %vm1103, %v1464, 0.0
    %1478 = vadd.xlane.f32.xlu0 %v1477
    %v1479 = vpop.xlane.xlu0 %1478
    %v1480 = vmul.f32 %v1467, %v1107
    %v1481 = vmul.f32 %v1470, %v1107
    %v1482 = vmul.f32 %v1473, %v1107
    %v1483 = vmul.f32 %v1476, %v1107
    %v1484 = vmul.f32 %v1479, %v1107
    %v1485 = vsub.f32 %v1460, %v1480
    %v1486 = vsub.f32 %v1461, %v1481
    %v1487 = vsub.f32 %v1462, %v1482
    %v1488 = vsub.f32 %v1463, %v1483
    %v1489 = vsub.f32 %v1464, %v1484
    %v1490 = vmul.f32 %v1485, %v1485
    %v1491 = vmul.f32 %v1486, %v1486
    %v1492 = vmul.f32 %v1487, %v1487
    %v1493 = vmul.f32 %v1488, %v1488
    %v1494 = vmul.f32 %v1489, %v1489
    %v1495 = vsel %vm156, %v1490, 0.0
    %1496 = vadd.xlane.f32.xlu0 %v1495
    %v1497 = vpop.xlane.xlu0 %1496
    %v1498 = vsel %vm156, %v1491, 0.0
    %1499 = vadd.xlane.f32.xlu0 %v1498
    %v1500 = vpop.xlane.xlu0 %1499
    %v1501 = vsel %vm156, %v1492, 0.0
    %1502 = vadd.xlane.f32.xlu0 %v1501
    %v1503 = vpop.xlane.xlu0 %1502
    %v1504 = vsel %vm156, %v1493, 0.0
    %1505 = vadd.xlane.f32.xlu0 %v1504
    %v1506 = vpop.xlane.xlu0 %1505
    %v1507 = vsel %vm1103, %v1494, 0.0
    %1508 = vadd.xlane.f32.xlu0 %v1507
    %v1509 = vpop.xlane.xlu0 %1508
    %v1510 = vmul.f32 %v1497, %v1107
    %v1511 = vmul.f32 %v1500, %v1107
    %v1512 = vmul.f32 %v1503, %v1107
    %v1513 = vmul.f32 %v1506, %v1107
    %v1514 = vmul.f32 %v1509, %v1107
    %v1515 = vadd.f32 %v1510, 1e-12
    %v1516 = vadd.f32 %v1511, 1e-12
    %v1517 = vadd.f32 %v1512, 1e-12
    %v1518 = vadd.f32 %v1513, 1e-12
    %v1519 = vadd.f32 %v1514, 1e-12
    %v1520 = vrsqrt.pop %v1515
    %v1521 = vrsqrt.pop %v1516
    %v1522 = vrsqrt.pop %v1517
    %v1523 = vrsqrt.pop %v1518
    %v1524 = vrsqrt.pop %v1519
    %v1525 = vmul.f32 %v1485, %v1520
    %v1526 = vmul.f32 %v1486, %v1521
    %v1527 = vmul.f32 %v1487, %v1522
    %v1528 = vmul.f32 %v1488, %v1523
    %v1529 = vmul.f32 %v1489, %v1524
    %v1530 = vlaneseq
    %v1531 = vshrl.u32 %v1530, 7
    %v1532 = vsub.s32 0, %v1531
    %v1533 = vrot.slane %v104, %v1532
    %v1534 = vmul.f32 %v1525, %v1533
    %v1535 = vmul.f32 %v1526, %v1533
    %v1536 = vmul.f32 %v1527, %v1533
    %v1537 = vmul.f32 %v1528, %v1533
    %v1538 = vmul.f32 %v1529, %v1533
    %v1539 = vlaneseq
    %v1540 = vshrl.u32 %v1539, 7
    %v1541 = vsub.s32 0, %v1540
    %v1542 = vrot.slane %v105, %v1541
    %v1543 = vadd.f32 %v1534, %v1542
    %v1544 = vadd.f32 %v1535, %v1542
    %v1545 = vadd.f32 %v1536, %v1542
    %v1546 = vadd.f32 %v1537, %v1542
    %v1547 = vadd.f32 %v1538, %v1542
    %s1548 = ssub.s32 %s347, 2
    %v1549 = vstv %s1548
    %vm1550 = vcmp.lt.s32.totalorder %v258, %v1549
    %v1551 = vsel %vm1550, 1, 0
    %vm1552 = vcmp.eq.s32.totalorder %v1551, 1
    %vm1555 = vcmask 1046528
    %v1556 = vrot.slane %v1543, 1
    %v1557 = vrot.slane %v1544, 1
    %v1558 = vsel %vm1555, %v1556, %v1557
    %v1560 = vsel %vm1552, %v1558, 0.0
    %1561 = vst.msk [vmem:[#allocation12] sm:$0xff] %vm156, %v1560
    %s1562 = sld [smem:[#allocation3 + $0x1]]
    %s1563 = ssub.s32 %s1562, 2
    %v1564 = vstv %s1563
    %vm1565 = vcmp.lt.s32.totalorder %v258, %v1564
    %v1566 = vsel %vm1565, 1, 0
    %vm1567 = vcmp.eq.s32.totalorder %v1566, 1
    %vm1569 = vcmask 1042432
    %v1570 = vrot.slane %v1544, 5
    %v1571 = vrot.slane %v1545, 5
    %v1572 = vsel %vm1569, %v1570, %v1571
    %v1574 = vsel %vm1567, %v1572, 0.0
    %1575 = vst.msk [vmem:[#allocation12 + $0x8] sm:$0xff] %vm156, %v1574
    %s1576 = sld [smem:[#allocation3 + $0x2]]
    %s1577 = ssub.s32 %s1576, 2
    %v1578 = vstv %s1577
    %vm1579 = vcmp.lt.s32.totalorder %v258, %v1578
    %v1580 = vsel %vm1579, 1, 0
    %vm1581 = vcmp.eq.s32.totalorder %v1580, 1
    %v1584 = vrot.slane %v1546, 1
    %v1585 = vrot.slane %v1547, 1
    %v1586 = vsel %vm1555, %v1584, %v1585
    %v1588 = vsel %vm1581, %v1586, 0.0
    %1589 = vst.msk [vmem:[#allocation12 + $0x10] sm:$0xff] %vm156, %v1588
    // Predicated region
    $region34: #{tpu_custom_call.1} parent=1 // pred_check
      _
    $region35: #{tpu_custom_call.1} parent=1 // pred_check_branch
      %1591 = sbr.rel (0) target = $region37
    $region36: #{tpu_custom_call.1} parent=1 // pred_region
      %s1593 = ssub.s32 384, 384
      %1594 = vsyncadd [#allocation6], %s1593
      %s1595 = sshll.u32 [#allocation12], 4
      %s1596 = int_to_ptr.vmem [resolvable:$true] %s1595
      %1601 = dma.vmem_to_hbm [thread:$0]  %s1596, 384, %s5, [#allocation6], 128, 128, 8
    $region37: #{tpu_custom_call.1} parent=1 // pred_fallthru
      _
    // Predicated region
    $region38: #{tpu_custom_call.1} parent=1 // pred_check
      _
    $region39: #{tpu_custom_call.1} parent=1 // pred_check_branch
      %1603 = sbr.rel (0) target = $region41
    $region40: #{tpu_custom_call.1} parent=1 // pred_region
      %1604 = dma.done [#allocation6], 384
    $region41: #{tpu_custom_call.1} parent=1 // pred_fallthru
      _
    %1605 = vsyncpa [#allocation5], 1
    %1606 = vsyncpa [#allocation8], 1
    %1607 = vsyncpa [#allocation11], 1
    %1608 = vsyncpa [#allocation6], 1

</llo_original>
